<compile_context>
chip_gen: v5e
topology: v5e:2x2
jax: 0.10.0
libtpu: 0.0.40
codegen_flags: <defaults>
</compile_context>

<pallas_src>
import jax
import jax.numpy as jnp
import numpy as np
from jax.experimental import pallas as pl
from jax.experimental.pallas import tpu as pltpu

LPAD = 8   # left W-halo padded to a full sublane group -> aligned identity load


def _vmem_capacity_bytes():
    try:
        info = pltpu.get_tpu_info()
        for attr in ("vmem_capacity_bytes", "vmem_bytes", "vmem_size_bytes"):
            v = getattr(info, attr, None)
            if v:
                return int(v)
    except Exception:
        pass
    return 64 * 1024 * 1024            # conservative fallback (v7x per-core VMEM)


def fold_bn(gamma, beta, mean, var, eps=1e-5):
    scale = gamma / jnp.sqrt(var + eps)
    bias = beta - mean * scale
    return (scale.astype(jnp.float32).reshape(1, -1),
            bias.astype(jnp.float32).reshape(1, -1))


def _pick_row_tile(H, WP, C, act_bytes, out_bytes, budget_bytes):
    """Largest divisor of H whose per-step VMEM footprint fits the budget."""
    xw = LPAD + WP + 1

    def est(th):
        x_blk = 2 * (H + 4) * xw * C * act_bytes        # double-buffered image
        w_blk = 2 * 2 * 9 * C * C * act_bytes           # both weight blocks
        o_blk = 2 * th * WP * C * out_bytes             # double-buffered output
        slab = (th + 4) * WP * 3 * C * act_bytes        # im2col scratch
        live = 3 * (th + 2) * WP * C * 4                # f32 accumulators / y1
        return x_blk + w_blk + o_blk + slab + live

    divisors = sorted((d for d in range(1, H + 1) if H % d == 0), reverse=True)
    for th in divisors:
        if est(th) <= budget_bytes:
            return th
    return divisors[-1]


def basic_block_forward(x_nchw, w1_oihw, w2_oihw, bn1, bn2, *,
                        compute_dtype=jnp.bfloat16, row_tile=None,
                        out_dtype=None):
    """BasicBlock forward (stride=1, identity shortcut). x_nchw: (N, C, H, W)."""
    N, C, H, W = x_nchw.shape
    assert w1_oihw.shape == (C, C, 3, 3) and w2_oihw.shape == (C, C, 3, 3), (
        "identity-shortcut BasicBlock requires inplanes == planes")
    out_dtype = x_nchw.dtype if out_dtype is None else out_dtype
    act_bytes = jnp.dtype(compute_dtype).itemsize
    out_bytes = jnp.dtype(out_dtype).itemsize

    WP = ((W + 7) // 8) * 8            # sublane-pad W -> free row-merging reshapes
    XW = LPAD + WP + 1                 # padded input width

    vmem_cap = _vmem_capacity_bytes()
    vmem_limit = int(min(0.60 * vmem_cap, 64 * 1024 * 1024))
    tile_budget = int(min(0.34 * vmem_cap, 40 * 1024 * 1024))

    if row_tile is None:
        row_tile = _pick_row_tile(H, WP, C, act_bytes, out_bytes, tile_budget)
    if H % row_tile != 0:
        raise ValueError(f"row_tile={row_tile} must divide H={H}")
    TH = row_tile
    grid = (N, H // TH)

    # NCHW -> NHWC; H padded by 2 each side (conv1+conv2 halo); W padded by
    # LPAD zeros on the left (aligned halo) and 1 + (WP - W) zeros on the right.
    x_nhwc = jnp.transpose(x_nchw, (0, 2, 3, 1))
    xpad = jnp.pad(x_nhwc, ((0, 0), (2, 2), (LPAD, 1 + WP - W),
                            (0, 0))).astype(compute_dtype)

    s1, b1 = fold_bn(*bn1)
    s2, b2 = fold_bn(*bn2)
    biases = jnp.concatenate([b1, b2], axis=0)          # (2, C) f32

    def im2col_weights(w_oihw, scale):
        # OIHW -> (kh, kw*Cin, Cout); fold the BN scale into output channels.
        w = jnp.transpose(w_oihw, (2, 3, 1, 0)).reshape(3, 3 * C, C)
        return (w * scale.reshape(1, 1, C)).astype(compute_dtype)

    w1f = im2col_weights(w1_oihw, s1)
    w2f = im2col_weights(w2_oihw, s2)

    def kernel(x_ref, w1_ref, w2_ref, b_ref, out_ref, col_ref):
        # x_ref  : (H+4, XW, C)     padded input image of batch element n
        # w*_ref : (3, 3C, C)       per-kh weight matrices, BN scale folded in
        # b_ref  : (2, C) f32       bn1 / bn2 biases
        # out_ref: (TH, WP, C)      output row strip
        # col_ref: (TH+4, WP, 3C)   kw-only im2col slab, reused by both convs
        h = pl.program_id(1)
        last_h = pl.num_programs(1) - 1
        r0 = pl.multiple_of(h * TH, TH)          # first output row of the strip

        # ---- conv1: kw-only im2col over x rows r0 .. r0+TH+3 ----------------
        for dx in range(3):
            col_ref[:, :, dx * C:(dx + 1) * C] = x_ref[
                pl.ds(r0, TH + 4), pl.ds(LPAD - 1 + dx, WP), :]

        # 3 accumulating K=3C matmuls; the dy shift is a free leading-dim slice.
        acc1 = jnp.dot(col_ref[0:TH + 2, :, :].reshape((TH + 2) * WP, 3 * C),
                       w1_ref[0], preferred_element_type=jnp.float32)
        for dy in (1, 2):
            acc1 += jnp.dot(
                col_ref[dy:dy + TH + 2, :, :].reshape((TH + 2) * WP, 3 * C),
                w1_ref[dy], preferred_element_type=jnp.float32)
        y1 = jnp.maximum(acc1 + b_ref[0:1, :], 0.0)        # bn1 bias + ReLU
        y1 = y1.reshape(TH + 2, WP, C).astype(col_ref.dtype)

        # ---- conv2: write y1 straight into the slab at its 3 kw shifts ------
        col_ref[0:TH + 2, :, C:2 * C] = y1                             # dx = 1
        col_ref[0:TH + 2, 1:WP, 0:C] = y1[:, 0:WP - 1, :]              # dx = 0
        col_ref[0:TH + 2, 0:1, 0:C] = jnp.zeros((TH + 2, 1, C), col_ref.dtype)
        if W > 1:
            col_ref[0:TH + 2, 0:W - 1, 2 * C:3 * C] = y1[:, 1:W, :]    # dx = 2
        col_ref[0:TH + 2, W - 1:WP, 2 * C:3 * C] = jnp.zeros(
            (TH + 2, WP - W + 1, C), col_ref.dtype)

        # conv2 H-halo rows are zero only at the image border (interior rows
        # are fully rewritten above, so nothing stale leaks between steps).
        @pl.when(h == 0)
        def _():
            col_ref[0:1, :, :] = jnp.zeros((1, WP, 3 * C), col_ref.dtype)

        @pl.when(h == last_h)
        def _():
            col_ref[TH + 1:TH + 2, :, :] = jnp.zeros((1, WP, 3 * C),
                                                     col_ref.dtype)

        acc2 = jnp.dot(col_ref[0:TH, :, :].reshape(TH * WP, 3 * C),
                       w2_ref[0], preferred_element_type=jnp.float32)
        for dy in (1, 2):
            acc2 += jnp.dot(col_ref[dy:dy + TH, :, :].reshape(TH * WP, 3 * C),
                            w2_ref[dy], preferred_element_type=jnp.float32)

        # residual add (identity shortcut, aligned load) + bn2 bias + ReLU
        ident = x_ref[pl.ds(r0 + 2, TH), pl.ds(LPAD, WP), :]
        out = jnp.maximum(acc2 + b_ref[1:2, :]
                          + ident.astype(jnp.float32).reshape(TH * WP, C), 0.0)
        out_ref[...] = out.reshape(TH, WP, C).astype(out_ref.dtype)

    flops = 2 * 2 * 9 * N * H * W * C * C
    bytes_accessed = (N * (H + 4) * XW * C * act_bytes
                      + 2 * 3 * 3 * C * C * act_bytes
                      + N * H * WP * C * out_bytes)

    out_nhwc = pl.pallas_call(
        kernel,
        out_shape=jax.ShapeDtypeStruct((N, H, WP, C), out_dtype),
        grid_spec=pltpu.PrefetchScalarGridSpec(
            num_scalar_prefetch=0,
            grid=grid,
            in_specs=[
                pl.BlockSpec((None, H + 4, XW, C), lambda n, h: (n, 0, 0, 0)),
                pl.BlockSpec((3, 3 * C, C), lambda n, h: (0, 0, 0)),
                pl.BlockSpec((3, 3 * C, C), lambda n, h: (0, 0, 0)),
                pl.BlockSpec((2, C), lambda n, h: (0, 0)),
            ],
            out_specs=pl.BlockSpec((None, TH, WP, C), lambda n, h: (n, h, 0, 0)),
            scratch_shapes=[
                pltpu.VMEM((TH + 4, WP, 3 * C), compute_dtype),   # im2col slab
            ],
        ),
        compiler_params=pltpu.CompilerParams(
            dimension_semantics=("parallel", "parallel"),
            vmem_limit_bytes=vmem_limit),
        cost_estimate=pl.CostEstimate(flops=flops, transcendentals=0,
                                      bytes_accessed=bytes_accessed),
    )(xpad, w1f, w2f, biases)

    if WP != W:
        out_nhwc = out_nhwc[:, :, :W, :]
    return jnp.transpose(out_nhwc, (0, 3, 1, 2))          # back to NCHW


# ----------------------- plain-JAX reference (for checking) -----------------
def reference_forward(x, w1, w2, bn1, bn2, eps=1e-5):
    def conv(x, w):
        return jax.lax.conv_general_dilated(
            x, w, window_strides=(1, 1), padding=((1, 1), (1, 1)),
            dimension_numbers=('NCHW', 'OIHW', 'NCHW'))

    def bn(x, g, b, m, v):
        s = g / jnp.sqrt(v + eps)
        return x * s[None, :, None, None] + (b - m * s)[None, :, None, None]

    out = jax.nn.relu(bn(conv(x, w1), *bn1))
    out = bn(conv(out, w2), *bn2)
    return jax.nn.relu(out + x)


if __name__ == "__main__":
    key = jax.random.PRNGKey(0)
    N, C, H, W = 2, 8, 16, 16          # inplanes == planes, stride=1

    ks = jax.random.split(key, 9)
    x = jax.random.normal(ks[0], (N, C, H, W), jnp.float32)
    w1 = jax.random.normal(ks[1], (C, C, 3, 3), jnp.float32) * 0.1   # OIHW
    w2 = jax.random.normal(ks[2], (C, C, 3, 3), jnp.float32) * 0.1   # OIHW
    bn1 = (jax.random.uniform(ks[3], (C,), jnp.float32, 0.5, 1.5),   # gamma
           jax.random.normal(ks[4], (C,), jnp.float32) * 0.1,        # beta
           jax.random.normal(ks[5], (C,), jnp.float32) * 0.1,        # running mean
           jax.random.uniform(ks[6], (C,), jnp.float32, 0.5, 1.5))   # running var
    bn2 = (jnp.ones((C,), jnp.float32),
           jnp.zeros((C,), jnp.float32),
           jax.random.normal(ks[7], (C,), jnp.float32) * 0.1,
           jnp.ones((C,), jnp.float32))

    # 1) f32 compute path, explicit 4-row strips (interior + border tiles,
    #    exercises the halo / boundary-row logic).
    out_f32 = basic_block_forward(x, w1, w2, bn1, bn2,
                                  compute_dtype=jnp.float32, row_tile=4)
    out_f32 = jax.block_until_ready(out_f32)
    ref = reference_forward(x, w1, w2, bn1, bn2)
    np.testing.assert_allclose(np.asarray(out_f32), np.asarray(ref),
                               rtol=2e-2, atol=2e-2)

    # 2) Default bf16 compute path, auto row-tile.  Compare against the f32
    #    reference evaluated on bf16-rounded inputs/weights.
    out_bf16 = basic_block_forward(x, w1, w2, bn1, bn2)
    out_bf16 = jax.block_until_ready(out_bf16)
    xq = x.astype(jnp.bfloat16).astype(jnp.float32)
    w1q = w1.astype(jnp.bfloat16).astype(jnp.float32)
    w2q = w2.astype(jnp.bfloat16).astype(jnp.float32)
    ref_bf16 = reference_forward(xq, w1q, w2q, bn1, bn2)
    np.testing.assert_allclose(np.asarray(out_bf16), np.asarray(ref_bf16),
                               rtol=4e-2, atol=4e-2)

    # 3) Non-multiple-of-8 width (exercises the W -> WP sublane padding path,
    #    the regime ResNet stages 28/14/7 hit).
    x3 = jax.random.normal(ks[8], (1, C, H, 12), jnp.float32)
    out3 = basic_block_forward(x3, w1, w2, bn1, bn2,
                               compute_dtype=jnp.float32, row_tile=8)
    out3 = jax.block_until_ready(out3)
    ref3 = reference_forward(x3, w1, w2, bn1, bn2)
    np.testing.assert_allclose(np.asarray(out3), np.asarray(ref3),
                               rtol=2e-2, atol=2e-2)

    print("KERNEL_OK")
</pallas_src>

<mosaic_0001>
module attributes {stable_mosaic.version = 11 : i64} {
  func.func @kernel(%arg0: i32, %arg1: i32, %arg2: memref<1x20x25x8xf32, #tpu.memory_space<vmem>>, %arg3: memref<3x24x8xf32, #tpu.memory_space<vmem>>, %arg4: memref<3x24x8xf32, #tpu.memory_space<vmem>>, %arg5: memref<2x8xf32, #tpu.memory_space<vmem>>, %arg6: memref<1x4x16x8xf32, #tpu.memory_space<vmem>>, %arg7: memref<8x16x24xf32, #tpu.memory_space<vmem>>) attributes {dimension_semantics = [#tpu.dimension_semantics<parallel>, #tpu.dimension_semantics<parallel>], iteration_bounds = array<i64: 2, 4>, scalar_prefetch = 0 : i64, scratch_operands = 1 : i64, tpu.core_type = #tpu.core_type<tc>, window_params = [{transform_indices = @transform_0, window_bounds = array<i64: 1, 20, 25, 8>}, {pipeline_mode = #tpu.pipeline_mode<synchronous>, transform_indices = @transform_1, window_bounds = array<i64: 3, 24, 8>}, {pipeline_mode = #tpu.pipeline_mode<synchronous>, transform_indices = @transform_2, window_bounds = array<i64: 3, 24, 8>}, {pipeline_mode = #tpu.pipeline_mode<synchronous>, transform_indices = @transform_3, window_bounds = array<i64: 2, 8>}, {transform_indices = @transform_4, window_bounds = array<i64: 1, 4, 16, 8>}]} {
    %c4_i32 = arith.constant 4 : i32
    %0 = arith.muli %arg1, %c4_i32 : i32
    %1 = tpu.assume_multiple %0, 4 : i32
    %c0 = arith.constant 0 : index
    %2 = arith.index_cast %1 : i32 to index
    %c7 = arith.constant 7 : index
    %c0_0 = arith.constant 0 : index
    %3 = vector.load %arg2[%c0, %2, %c7, %c0_0] : memref<1x20x25x8xf32, #tpu.memory_space<vmem>>, vector<1x8x16x8xf32>
    %4 = vector.shape_cast %3 : vector<1x8x16x8xf32> to vector<8x16x8xf32>
    %c0_1 = arith.constant 0 : index
    %c0_2 = arith.constant 0 : index
    %c0_3 = arith.constant 0 : index
    %5 = vector.load %arg7[%c0_1, %c0_2, %c0_3] : memref<8x16x24xf32, #tpu.memory_space<vmem>>, vector<8x16x8xf32>
    tpu.vector_store %arg7[%c0_1, %c0_2, %c0_3], %4 {strides = array<i32>} : memref<8x16x24xf32, #tpu.memory_space<vmem>>, vector<8x16x8xf32>,
    %c0_4 = arith.constant 0 : index
    %6 = arith.index_cast %1 : i32 to index
    %c8 = arith.constant 8 : index
    %c0_5 = arith.constant 0 : index
    %7 = vector.load %arg2[%c0_4, %6, %c8, %c0_5] : memref<1x20x25x8xf32, #tpu.memory_space<vmem>>, vector<1x8x16x8xf32>
    %8 = vector.shape_cast %7 : vector<1x8x16x8xf32> to vector<8x16x8xf32>
    %c0_6 = arith.constant 0 : index
    %c0_7 = arith.constant 0 : index
    %c8_8 = arith.constant 8 : index
    %9 = vector.load %arg7[%c0_6, %c0_7, %c8_8] : memref<8x16x24xf32, #tpu.memory_space<vmem>>, vector<8x16x8xf32>
    tpu.vector_store %arg7[%c0_6, %c0_7, %c8_8], %8 {strides = array<i32>} : memref<8x16x24xf32, #tpu.memory_space<vmem>>, vector<8x16x8xf32>,
    %c0_9 = arith.constant 0 : index
    %10 = arith.index_cast %1 : i32 to index
    %c9 = arith.constant 9 : index
    %c0_10 = arith.constant 0 : index
    %11 = vector.load %arg2[%c0_9, %10, %c9, %c0_10] : memref<1x20x25x8xf32, #tpu.memory_space<vmem>>, vector<1x8x16x8xf32>
    %12 = vector.shape_cast %11 : vector<1x8x16x8xf32> to vector<8x16x8xf32>
    %c0_11 = arith.constant 0 : index
    %c0_12 = arith.constant 0 : index
    %c16 = arith.constant 16 : index
    %13 = vector.load %arg7[%c0_11, %c0_12, %c16] : memref<8x16x24xf32, #tpu.memory_space<vmem>>, vector<8x16x8xf32>
    tpu.vector_store %arg7[%c0_11, %c0_12, %c16], %12 {strides = array<i32>} : memref<8x16x24xf32, #tpu.memory_space<vmem>>, vector<8x16x8xf32>,
    %c0_13 = arith.constant 0 : index
    %c0_14 = arith.constant 0 : index
    %c0_15 = arith.constant 0 : index
    %14 = vector.load %arg7[%c0_13, %c0_14, %c0_15] : memref<8x16x24xf32, #tpu.memory_space<vmem>>, vector<6x16x24xf32>
    %15 = vector.shape_cast %14 : vector<6x16x24xf32> to vector<96x24xf32>
    %c0_16 = arith.constant 0 : index
    %c0_17 = arith.constant 0 : index
    %c0_18 = arith.constant 0 : index
    %16 = vector.load %arg3[%c0_16, %c0_17, %c0_18] : memref<3x24x8xf32, #tpu.memory_space<vmem>>, vector<1x24x8xf32>
    %17 = vector.shape_cast %16 : vector<1x24x8xf32> to vector<24x8xf32>
    %cst = arith.constant dense<0.000000e+00> : vector<96x8xf32>
    %18 = tpu.matmul %15, %17, %cst {dimension_numbers = #tpu.dot_dimension_numbers<[1], [0], [0], [1], [0, 0, 1, 1], [], []>} : vector<96x24xf32>, vector<24x8xf32>, vector<96x8xf32> -> vector<96x8xf32>
    %c1 = arith.constant 1 : index
    %c0_19 = arith.constant 0 : index
    %c0_20 = arith.constant 0 : index
    %19 = vector.load %arg7[%c1, %c0_19, %c0_20] : memref<8x16x24xf32, #tpu.memory_space<vmem>>, vector<6x16x24xf32>
    %20 = vector.shape_cast %19 : vector<6x16x24xf32> to vector<96x24xf32>
    %c1_21 = arith.constant 1 : index
    %c0_22 = arith.constant 0 : index
    %c0_23 = arith.constant 0 : index
    %21 = vector.load %arg3[%c1_21, %c0_22, %c0_23] : memref<3x24x8xf32, #tpu.memory_space<vmem>>, vector<1x24x8xf32>
    %22 = vector.shape_cast %21 : vector<1x24x8xf32> to vector<24x8xf32>
    %cst_24 = arith.constant dense<0.000000e+00> : vector<96x8xf32>
    %23 = tpu.matmul %20, %22, %cst_24 {dimension_numbers = #tpu.dot_dimension_numbers<[1], [0], [0], [1], [0, 0, 1, 1], [], []>} : vector<96x24xf32>, vector<24x8xf32>, vector<96x8xf32> -> vector<96x8xf32>
    %24 = arith.addf %18, %23 : vector<96x8xf32>
    %c2 = arith.constant 2 : index
    %c0_25 = arith.constant 0 : index
    %c0_26 = arith.constant 0 : index
    %25 = vector.load %arg7[%c2, %c0_25, %c0_26] : memref<8x16x24xf32, #tpu.memory_space<vmem>>, vector<6x16x24xf32>
    %26 = vector.shape_cast %25 : vector<6x16x24xf32> to vector<96x24xf32>
    %c2_27 = arith.constant 2 : index
    %c0_28 = arith.constant 0 : index
    %c0_29 = arith.constant 0 : index
    %27 = vector.load %arg3[%c2_27, %c0_28, %c0_29] : memref<3x24x8xf32, #tpu.memory_space<vmem>>, vector<1x24x8xf32>
    %28 = vector.shape_cast %27 : vector<1x24x8xf32> to vector<24x8xf32>
    %cst_30 = arith.constant dense<0.000000e+00> : vector<96x8xf32>
    %29 = tpu.matmul %26, %28, %cst_30 {dimension_numbers = #tpu.dot_dimension_numbers<[1], [0], [0], [1], [0, 0, 1, 1], [], []>} : vector<96x24xf32>, vector<24x8xf32>, vector<96x8xf32> -> vector<96x8xf32>
    %30 = arith.addf %24, %29 : vector<96x8xf32>
    %c0_31 = arith.constant 0 : index
    %c0_32 = arith.constant 0 : index
    %31 = vector.load %arg5[%c0_31, %c0_32] : memref<2x8xf32, #tpu.memory_space<vmem>>, vector<1x8xf32>
    %32 = vector.broadcast %31 : vector<1x8xf32> to vector<96x8xf32>
    %33 = arith.addf %30, %32 : vector<96x8xf32>
    %cst_33 = arith.constant 0.000000e+00 : f32
    %34 = vector.broadcast %cst_33 : f32 to vector<96x8xf32>
    %35 = arith.maximumf %33, %34 : vector<96x8xf32>
    %36 = vector.shape_cast %35 : vector<96x8xf32> to vector<6x16x8xf32>
    %c0_34 = arith.constant 0 : index
    %c0_35 = arith.constant 0 : index
    %c8_36 = arith.constant 8 : index
    %37 = vector.load %arg7[%c0_34, %c0_35, %c8_36] : memref<8x16x24xf32, #tpu.memory_space<vmem>>, vector<6x16x8xf32>
    tpu.vector_store %arg7[%c0_34, %c0_35, %c8_36], %36 {strides = array<i32>} : memref<8x16x24xf32, #tpu.memory_space<vmem>>, vector<6x16x8xf32>,
    %38 = vector.extract_strided_slice %36 {offsets = [0, 0, 0], sizes = [6, 15, 8], strides = [1, 1, 1]} : vector<6x16x8xf32> to vector<6x15x8xf32>
    %c0_37 = arith.constant 0 : index
    %c1_38 = arith.constant 1 : index
    %c0_39 = arith.constant 0 : index
    %39 = vector.load %arg7[%c0_37, %c1_38, %c0_39] : memref<8x16x24xf32, #tpu.memory_space<vmem>>, vector<6x15x8xf32>
    tpu.vector_store %arg7[%c0_37, %c1_38, %c0_39], %38 {strides = array<i32>} : memref<8x16x24xf32, #tpu.memory_space<vmem>>, vector<6x15x8xf32>,
    %cst_40 = arith.constant 0.000000e+00 : f32
    %40 = vector.broadcast %cst_40 : f32 to vector<6x1x8xf32>
    %c0_41 = arith.constant 0 : index
    %c0_42 = arith.constant 0 : index
    %c0_43 = arith.constant 0 : index
    %41 = vector.load %arg7[%c0_41, %c0_42, %c0_43] : memref<8x16x24xf32, #tpu.memory_space<vmem>>, vector<6x1x8xf32>
    tpu.vector_store %arg7[%c0_41, %c0_42, %c0_43], %40 {strides = array<i32>} : memref<8x16x24xf32, #tpu.memory_space<vmem>>, vector<6x1x8xf32>,
    %42 = vector.extract_strided_slice %36 {offsets = [0, 1, 0], sizes = [6, 15, 8], strides = [1, 1, 1]} : vector<6x16x8xf32> to vector<6x15x8xf32>
    %c0_44 = arith.constant 0 : index
    %c0_45 = arith.constant 0 : index
    %c16_46 = arith.constant 16 : index
    %43 = vector.load %arg7[%c0_44, %c0_45, %c16_46] : memref<8x16x24xf32, #tpu.memory_space<vmem>>, vector<6x15x8xf32>
    tpu.vector_store %arg7[%c0_44, %c0_45, %c16_46], %42 {strides = array<i32>} : memref<8x16x24xf32, #tpu.memory_space<vmem>>, vector<6x15x8xf32>,
    %cst_47 = arith.constant 0.000000e+00 : f32
    %44 = vector.broadcast %cst_47 : f32 to vector<6x1x8xf32>
    %c0_48 = arith.constant 0 : index
    %c15 = arith.constant 15 : index
    %c16_49 = arith.constant 16 : index
    %45 = vector.load %arg7[%c0_48, %c15, %c16_49] : memref<8x16x24xf32, #tpu.memory_space<vmem>>, vector<6x1x8xf32>
    tpu.vector_store %arg7[%c0_48, %c15, %c16_49], %44 {strides = array<i32>} : memref<8x16x24xf32, #tpu.memory_space<vmem>>, vector<6x1x8xf32>,
    %c0_i32 = arith.constant 0 : i32
    %46 = arith.cmpi eq, %arg1, %c0_i32 : i32
    %47 = arith.extui %46 : i1 to i32
    %c0_i32_50 = arith.constant 0 : i32
    %48 = arith.cmpi ne, %47, %c0_i32_50 : i32
    scf.if %48 {
      %cst_83 = arith.constant 0.000000e+00 : f32
      %84 = vector.broadcast %cst_83 : f32 to vector<1x16x24xf32>
      %c0_84 = arith.constant 0 : index
      %c0_85 = arith.constant 0 : index
      %c0_86 = arith.constant 0 : index
      %85 = vector.load %arg7[%c0_84, %c0_85, %c0_86] : memref<8x16x24xf32, #tpu.memory_space<vmem>>, vector<1x16x24xf32>
      tpu.vector_store %arg7[%c0_84, %c0_85, %c0_86], %84 {strides = array<i32>} : memref<8x16x24xf32, #tpu.memory_space<vmem>>, vector<1x16x24xf32>,
    } else {
    }
    %c3_i32 = arith.constant 3 : i32
    %49 = arith.cmpi eq, %arg1, %c3_i32 : i32
    %50 = arith.extui %49 : i1 to i32
    %c0_i32_51 = arith.constant 0 : i32
    %51 = arith.cmpi ne, %50, %c0_i32_51 : i32
    scf.if %51 {
      %cst_83 = arith.constant 0.000000e+00 : f32
      %84 = vector.broadcast %cst_83 : f32 to vector<1x16x24xf32>
      %c5 = arith.constant 5 : index
      %c0_84 = arith.constant 0 : index
      %c0_85 = arith.constant 0 : index
      %85 = vector.load %arg7[%c5, %c0_84, %c0_85] : memref<8x16x24xf32, #tpu.memory_space<vmem>>, vector<1x16x24xf32>
      tpu.vector_store %arg7[%c5, %c0_84, %c0_85], %84 {strides = array<i32>} : memref<8x16x24xf32, #tpu.memory_space<vmem>>, vector<1x16x24xf32>,
    } else {
    }
    %c0_52 = arith.constant 0 : index
    %c0_53 = arith.constant 0 : index
    %c0_54 = arith.constant 0 : index
    %52 = vector.load %arg7[%c0_52, %c0_53, %c0_54] : memref<8x16x24xf32, #tpu.memory_space<vmem>>, vector<4x16x24xf32>
    %53 = vector.shape_cast %52 : vector<4x16x24xf32> to vector<64x24xf32>
    %c0_55 = arith.constant 0 : index
    %c0_56 = arith.constant 0 : index
    %c0_57 = arith.constant 0 : index
    %54 = vector.load %arg4[%c0_55, %c0_56, %c0_57] : memref<3x24x8xf32, #tpu.memory_space<vmem>>, vector<1x24x8xf32>
    %55 = vector.shape_cast %54 : vector<1x24x8xf32> to vector<24x8xf32>
    %cst_58 = arith.constant dense<0.000000e+00> : vector<64x8xf32>
    %56 = tpu.matmul %53, %55, %cst_58 {dimension_numbers = #tpu.dot_dimension_numbers<[1], [0], [0], [1], [0, 0, 1, 1], [], []>} : vector<64x24xf32>, vector<24x8xf32>, vector<64x8xf32> -> vector<64x8xf32>
    %c1_59 = arith.constant 1 : index
    %c0_60 = arith.constant 0 : index
    %c0_61 = arith.constant 0 : index
    %57 = vector.load %arg7[%c1_59, %c0_60, %c0_61] : memref<8x16x24xf32, #tpu.memory_space<vmem>>, vector<4x16x24xf32>
    %58 = vector.shape_cast %57 : vector<4x16x24xf32> to vector<64x24xf32>
    %c1_62 = arith.constant 1 : index
    %c0_63 = arith.constant 0 : index
    %c0_64 = arith.constant 0 : index
    %59 = vector.load %arg4[%c1_62, %c0_63, %c0_64] : memref<3x24x8xf32, #tpu.memory_space<vmem>>, vector<1x24x8xf32>
    %60 = vector.shape_cast %59 : vector<1x24x8xf32> to vector<24x8xf32>
    %cst_65 = arith.constant dense<0.000000e+00> : vector<64x8xf32>
    %61 = tpu.matmul %58, %60, %cst_65 {dimension_numbers = #tpu.dot_dimension_numbers<[1], [0], [0], [1], [0, 0, 1, 1], [], []>} : vector<64x24xf32>, vector<24x8xf32>, vector<64x8xf32> -> vector<64x8xf32>
    %62 = arith.addf %56, %61 : vector<64x8xf32>
    %c2_66 = arith.constant 2 : index
    %c0_67 = arith.constant 0 : index
    %c0_68 = arith.constant 0 : index
    %63 = vector.load %arg7[%c2_66, %c0_67, %c0_68] : memref<8x16x24xf32, #tpu.memory_space<vmem>>, vector<4x16x24xf32>
    %64 = vector.shape_cast %63 : vector<4x16x24xf32> to vector<64x24xf32>
    %c2_69 = arith.constant 2 : index
    %c0_70 = arith.constant 0 : index
    %c0_71 = arith.constant 0 : index
    %65 = vector.load %arg4[%c2_69, %c0_70, %c0_71] : memref<3x24x8xf32, #tpu.memory_space<vmem>>, vector<1x24x8xf32>
    %66 = vector.shape_cast %65 : vector<1x24x8xf32> to vector<24x8xf32>
    %cst_72 = arith.constant dense<0.000000e+00> : vector<64x8xf32>
    %67 = tpu.matmul %64, %66, %cst_72 {dimension_numbers = #tpu.dot_dimension_numbers<[1], [0], [0], [1], [0, 0, 1, 1], [], []>} : vector<64x24xf32>, vector<24x8xf32>, vector<64x8xf32> -> vector<64x8xf32>
    %68 = arith.addf %62, %67 : vector<64x8xf32>
    %c2_i32 = arith.constant 2 : i32
    %69 = arith.addi %1, %c2_i32 : i32
    %c0_73 = arith.constant 0 : index
    %70 = arith.index_cast %69 : i32 to index
    %c8_74 = arith.constant 8 : index
    %c0_75 = arith.constant 0 : index
    %71 = vector.load %arg2[%c0_73, %70, %c8_74, %c0_75] : memref<1x20x25x8xf32, #tpu.memory_space<vmem>>, vector<1x4x16x8xf32>
    %72 = vector.shape_cast %71 : vector<1x4x16x8xf32> to vector<4x16x8xf32>
    %c1_76 = arith.constant 1 : index
    %c0_77 = arith.constant 0 : index
    %73 = vector.load %arg5[%c1_76, %c0_77] : memref<2x8xf32, #tpu.memory_space<vmem>>, vector<1x8xf32>
    %74 = vector.broadcast %73 : vector<1x8xf32> to vector<64x8xf32>
    %75 = arith.addf %68, %74 : vector<64x8xf32>
    %76 = vector.shape_cast %72 : vector<4x16x8xf32> to vector<64x8xf32>
    %77 = arith.addf %75, %76 : vector<64x8xf32>
    %cst_78 = arith.constant 0.000000e+00 : f32
    %78 = vector.broadcast %cst_78 : f32 to vector<64x8xf32>
    %79 = arith.maximumf %77, %78 : vector<64x8xf32>
    %80 = vector.shape_cast %79 : vector<64x8xf32> to vector<4x16x8xf32>
    %c0_79 = arith.constant 0 : index
    %c0_80 = arith.constant 0 : index
    %c0_81 = arith.constant 0 : index
    %c0_82 = arith.constant 0 : index
    %81 = vector.load %arg6[%c0_79, %c0_80, %c0_81, %c0_82] : memref<1x4x16x8xf32, #tpu.memory_space<vmem>>, vector<1x4x16x8xf32>
    %82 = vector.shape_cast %81 : vector<1x4x16x8xf32> to vector<4x16x8xf32>
    %83 = vector.shape_cast %80 : vector<4x16x8xf32> to vector<1x4x16x8xf32>
    tpu.vector_store %arg6[%c0_79, %c0_80, %c0_81, %c0_82], %83 {strides = array<i32>} : memref<1x4x16x8xf32, #tpu.memory_space<vmem>>, vector<1x4x16x8xf32>,
    return
  }
  func.func @transform_0(%arg0: i32, %arg1: i32) -> (i32, i32, i32, i32) {
    %c0_i32 = arith.constant 0 : i32
    %c0_i32_0 = arith.constant 0 : i32
    %c0_i32_1 = arith.constant 0 : i32
    %c0_i32_2 = arith.constant 0 : i32
    return %arg0, %c0_i32, %c0_i32_0, %c0_i32_1 : i32, i32, i32, i32
  }
  func.func @transform_1(%arg0: i32, %arg1: i32) -> (i32, i32, i32) {
    %c0_i32 = arith.constant 0 : i32
    %c0_i32_0 = arith.constant 0 : i32
    %c0_i32_1 = arith.constant 0 : i32
    %c0_i32_2 = arith.constant 0 : i32
    return %c0_i32, %c0_i32_0, %c0_i32_1 : i32, i32, i32
  }
  func.func @transform_2(%arg0: i32, %arg1: i32) -> (i32, i32, i32) {
    %c0_i32 = arith.constant 0 : i32
    %c0_i32_0 = arith.constant 0 : i32
    %c0_i32_1 = arith.constant 0 : i32
    %c0_i32_2 = arith.constant 0 : i32
    return %c0_i32, %c0_i32_0, %c0_i32_1 : i32, i32, i32
  }
  func.func @transform_3(%arg0: i32, %arg1: i32) -> (i32, i32) {
    %c0_i32 = arith.constant 0 : i32
    %c0_i32_0 = arith.constant 0 : i32
    %c0_i32_1 = arith.constant 0 : i32
    return %c0_i32, %c0_i32_0 : i32, i32
  }
  func.func @transform_4(%arg0: i32, %arg1: i32) -> (i32, i32, i32, i32) {
    %c0_i32 = arith.constant 0 : i32
    %c0_i32_0 = arith.constant 0 : i32
    %c0_i32_1 = arith.constant 0 : i32
    return %arg0, %arg1, %c0_i32, %c0_i32_0 : i32, i32, i32, i32
  }
}

</mosaic_0001>

<llo_original>
// kernel: tpu_custom_call.1
$region0: #{tpu_custom_call.1}
  #allocation0 [shape = 'u32[]', space=smem, size = 0x4, offset = 0x4, fixed_abs, tag = 'smem constant byte address 0x4 - core index']
  #allocation1 [shape = 'u32[72,128]{1,0:T(1,128)}', space=vmem, size = 0x9000, scoped, tag = 'internal scratch']
  #allocation2 [shape = 'f32[8,16,24]{2,1,0:T(8,128)}', space=vmem, size = 0x10000, scoped, tag = 'scratch operand']
  %s0 = inlined_call_operand.vmem [shape: f32[2,20,25,8], index: 0, kind: input, shape index: {}]
  %s1 = inlined_call_operand.vmem [shape: f32[3,24,8], index: 1, kind: input, shape index: {}]
  %s2 = inlined_call_operand.vmem [shape: f32[3,24,8], index: 2, kind: input, shape index: {}]
  %s3 = inlined_call_operand.vmem [shape: f32[2,8], index: 3, kind: input, shape index: {}]
  %s4 = inlined_call_operand.vmem [shape: f32[2,16,16,8], index: 4, kind: output, shape index: {}]
  %s5 = sld [smem:[#allocation0]]
  $region57: #{tpu_custom_call.1} parent=0
    _
  %s7 = ssub.s32 1, %s5
  %s8 = scalar_select 0, %s7, %s5
  loop: start=0, step=1, limit=10
  $region2: #{tpu_custom_call.1} parent=0 // loop_pre_header
    _
  $region3: #{tpu_custom_call.1} parent=0 // loop_header
    %s10 = sphi 0, %s14
    %p11 = scmp.ge.s32.totalorder %s10, 10
    %s17 = sphi 0, %s29
    %s18 = sphi 0, %s25
    %s19 = sphi 0, %s17
    %s20 = sphi 0, %s18
    %s21 = sphi 0, %s19
    %s22 = sphi 0, %s20
    %s32 = sphi 0, %s34
    %s35 = sphi 0, %s32
    %s36 = sphi 0, %s35
    %s52 = sphi 0, %s36
    %s56 = sphi 0, %s56
    %s58 = sphi 0, %s56
    %s59 = sphi 0, %s58
    %s73 = sphi 0, %s59
    %s77 = sphi 0, %s77
    %s79 = sphi 0, %s77
    %s80 = sphi 0, %s79
    %s94 = sphi 0, %s80
    %s98 = sphi 0, %s98
    %s100 = sphi 0, %s98
    %s101 = sphi 0, %s100
    %s115 = sphi 0, %s101
    %s123 = sphi 0, %s125
    %s126 = sphi 0, %s123
    %s127 = sphi 0, %s126
    %s143 = sphi 0, %s127
  $region4: #{tpu_custom_call.1} parent=0 // loop_header_branch
    %13 = sbr.rel (%p11) target = $region8
  $region5: #{tpu_custom_call.1} parent=0 // loop_body
    %s15 = ssub.s32 %s10, 1
    %s16 = ssub.s32 %s10, 2
    %s23 = sadd.s32 1, %s18
    %p24 = scmp.ge.s32.totalorder %s23, 4
    %s25 = scalar_select %p24, 0, %s23
    %s26 = sadd.s32 1, %s17
    %s27 = scalar_select %p24, %s26, %s17
    %p28 = scmp.ge.s32.totalorder %s27, 2
    %s29 = scalar_select %p28, 0, %s27
    %s30 = ssub.s32 %s17, %s29
    %p31 = scmp.eq.s32.totalorder %s30, 0
    %s33 = sadd.s32 %s32, 1
    %s34 = scalar_select %p31, %s32, %s33
    %p37 = pneg %p31
    %p38 = scmp.eq.s32.totalorder %s10, 7
    %p39 = por %p37, %p38
    %p40 = scmp.ne.s32.totalorder %s32, %s35
    %p41 = scmp.eq.s32.totalorder %s10, 0
    %p42 = por %p40, %p41
    %p43 = scmp.ne.s32.totalorder %s32, %s35
    %p44 = scmp.eq.s32.totalorder %s15, 7
    %p45 = por %p43, %p44
    %p46 = scmp.ne.s32.totalorder %s35, %s36
    %p47 = scmp.eq.s32.totalorder %s15, 0
    %p48 = por %p46, %p47
    %p49 = scmp.ne.s32.totalorder %s35, %s36
    %p50 = scmp.eq.s32.totalorder %s16, 7
    %p51 = por %p49, %p50
    %p53 = scmp.ne.s32.totalorder %s36, %s52
    %p54 = scmp.eq.s32.totalorder %s16, 0
    %p55 = por %p53, %p54
    %s57 = sadd.s32 %s56, 1
    %p60 = scmp.eq.s32.totalorder %s10, 7
    %p61 = scmp.ne.s32.totalorder %s56, %s58
    %p62 = scmp.eq.s32.totalorder %s10, 0
    %p63 = por %p61, %p62
    %p64 = scmp.ne.s32.totalorder %s56, %s58
    %p65 = scmp.eq.s32.totalorder %s15, 7
    %p66 = por %p64, %p65
    %p67 = scmp.ne.s32.totalorder %s58, %s59
    %p68 = scmp.eq.s32.totalorder %s15, 0
    %p69 = por %p67, %p68
    %p70 = scmp.ne.s32.totalorder %s58, %s59
    %p71 = scmp.eq.s32.totalorder %s16, 7
    %p72 = por %p70, %p71
    %p74 = scmp.ne.s32.totalorder %s59, %s73
    %p75 = scmp.eq.s32.totalorder %s16, 0
    %p76 = por %p74, %p75
    %s78 = sadd.s32 %s77, 1
    %p81 = scmp.eq.s32.totalorder %s10, 7
    %p82 = scmp.ne.s32.totalorder %s77, %s79
    %p83 = scmp.eq.s32.totalorder %s10, 0
    %p84 = por %p82, %p83
    %p85 = scmp.ne.s32.totalorder %s77, %s79
    %p86 = scmp.eq.s32.totalorder %s15, 7
    %p87 = por %p85, %p86
    %p88 = scmp.ne.s32.totalorder %s79, %s80
    %p89 = scmp.eq.s32.totalorder %s15, 0
    %p90 = por %p88, %p89
    %p91 = scmp.ne.s32.totalorder %s79, %s80
    %p92 = scmp.eq.s32.totalorder %s16, 7
    %p93 = por %p91, %p92
    %p95 = scmp.ne.s32.totalorder %s80, %s94
    %p96 = scmp.eq.s32.totalorder %s16, 0
    %p97 = por %p95, %p96
    %s99 = sadd.s32 %s98, 1
    %p102 = scmp.eq.s32.totalorder %s10, 7
    %p103 = scmp.ne.s32.totalorder %s98, %s100
    %p104 = scmp.eq.s32.totalorder %s10, 0
    %p105 = por %p103, %p104
    %p106 = scmp.ne.s32.totalorder %s98, %s100
    %p107 = scmp.eq.s32.totalorder %s15, 7
    %p108 = por %p106, %p107
    %p109 = scmp.ne.s32.totalorder %s100, %s101
    %p110 = scmp.eq.s32.totalorder %s15, 0
    %p111 = por %p109, %p110
    %p112 = scmp.ne.s32.totalorder %s100, %s101
    %p113 = scmp.eq.s32.totalorder %s16, 7
    %p114 = por %p112, %p113
    %p116 = scmp.ne.s32.totalorder %s101, %s115
    %p117 = scmp.eq.s32.totalorder %s16, 0
    %p118 = por %p116, %p117
    %s119 = ssub.s32 %s17, %s29
    %s120 = ssub.s32 %s18, %s25
    %s121 = sor.u32 %s119, %s120
    %p122 = scmp.eq.s32.totalorder %s121, 0
    %s124 = sadd.s32 %s123, 1
    %s125 = scalar_select %p122, %s123, %s124
    %p128 = pneg %p122
    %p129 = scmp.eq.s32.totalorder %s10, 7
    %p130 = por %p128, %p129
    %p131 = scmp.ne.s32.totalorder %s123, %s126
    %p132 = scmp.eq.s32.totalorder %s10, 0
    %p133 = por %p131, %p132
    %p134 = scmp.ne.s32.totalorder %s123, %s126
    %p135 = scmp.eq.s32.totalorder %s15, 7
    %p136 = por %p134, %p135
    %p137 = scmp.ne.s32.totalorder %s126, %s127
    %p138 = scmp.eq.s32.totalorder %s15, 0
    %p139 = por %p137, %p138
    %p140 = scmp.ne.s32.totalorder %s126, %s127
    %p141 = scmp.eq.s32.totalorder %s16, 7
    %p142 = por %p140, %p141
    %p144 = scmp.ne.s32.totalorder %s127, %s143
    %p145 = scmp.eq.s32.totalorder %s16, 0
    %p146 = por %p144, %p145
    %p147 = scmp.le.s32.totalorder 1, %s10
    %p148 = scmp.lt.s32.totalorder %s10, 9
    %p149 = pnand %p147, %p148
    %p150 = pneg %p149
    // Predicated region
    $region9: #{tpu_custom_call.1} parent=5 // pred_check
      _
    $region10: #{tpu_custom_call.1} parent=5 // pred_check_branch
      %152 = sbr.rel (%p149) target = $region12
    $region11: #{tpu_custom_call.1} parent=5 // pred_region
      %s153 = ssub.s32 %s10, 1
      // Predicated region
      $region13: #{tpu_custom_call.1} parent=11 // pred_check
        %p154 = pneg %p69
      $region14: #{tpu_custom_call.1} parent=11 // pred_check_branch
        %156 = sbr.rel (%p154) target = $region16
      $region15: #{tpu_custom_call.1} parent=11 // pred_region
        _
      $region16: #{tpu_custom_call.1} parent=11 // pred_fallthru
        _
      // Predicated region
      $region17: #{tpu_custom_call.1} parent=11 // pred_check
        %p157 = pneg %p90
      $region18: #{tpu_custom_call.1} parent=11 // pred_check_branch
        %159 = sbr.rel (%p157) target = $region20
      $region19: #{tpu_custom_call.1} parent=11 // pred_region
        _
      $region20: #{tpu_custom_call.1} parent=11 // pred_fallthru
        _
      // Predicated region
      $region21: #{tpu_custom_call.1} parent=11 // pred_check
        %p160 = pneg %p111
      $region22: #{tpu_custom_call.1} parent=11 // pred_check_branch
        %162 = sbr.rel (%p160) target = $region24
      $region23: #{tpu_custom_call.1} parent=11 // pred_region
        _
      $region24: #{tpu_custom_call.1} parent=11 // pred_fallthru
        _
    $region12: #{tpu_custom_call.1} parent=5 // pred_fallthru
      _
    %p163 = scmp.lt.s32.totalorder %s10, 8
    // Predicated region
    $region25: #{tpu_custom_call.1} parent=5 // pred_check
      %p164 = pneg %p163
    $region26: #{tpu_custom_call.1} parent=5 // pred_check_branch
      %166 = sbr.rel (%p164) target = $region28
    $region27: #{tpu_custom_call.1} parent=5 // pred_region
      // Predicated region
      $region29: #{tpu_custom_call.1} parent=27 // pred_check
        %p167 = pneg %p42
      $region30: #{tpu_custom_call.1} parent=27 // pred_check_branch
        %169 = sbr.rel (%p167) target = $region32
      $region31: #{tpu_custom_call.1} parent=27 // pred_region
        %p170 = scmp.lt.s32.totalorder %s17, 1
        %s171 = scalar_select %p170, %s17, 1
        %s172 = smul.addr %s171, 80
        %s173 = smul.addr %s172, 8
        %s174 = scalar_lea.vmem %s0, %s173
      $region32: #{tpu_custom_call.1} parent=27 // pred_fallthru
        _
    $region28: #{tpu_custom_call.1} parent=5 // pred_fallthru
      _
    %p175 = scmp.le.s32.totalorder 1, %s10
    %p176 = scmp.lt.s32.totalorder %s10, 9
    %p177 = pnand %p175, %p176
    %p178 = pneg %p177
    // Predicated region
    $region33: #{tpu_custom_call.1} parent=5 // pred_check
      _
    $region34: #{tpu_custom_call.1} parent=5 // pred_check_branch
      %180 = sbr.rel (%p177) target = $region36
    $region35: #{tpu_custom_call.1} parent=5 // pred_region
      %s181 = ssub.s32 %s10, 1
      %p182 = scmp.lt.s32.totalorder %s19, 1
      %s183 = scalar_select %p182, %s19, 1
      %s184 = smul.addr %s183, 80
      %s185 = smul.addr %s184, 8
      %s186 = scalar_lea.vmem %s0, %s185
      %p187 = pneg %p48
      %p188 = pneg %p45
      %p189 = pneg %p69
      %p190 = pneg %p66
      %p191 = pneg %p90
      %p192 = pneg %p87
      %p193 = pneg %p111
      %p194 = pneg %p108
      %p195 = pneg %p139
      %p196 = pneg %p136
      %s197 = smul.u32 4, %s20
      %p198 = scmp.lt.s32.totalorder %s19, 1
      %s199 = scalar_select %p198, %s19, 1
      %p200 = scmp.lt.s32.totalorder %s197, 15
      %s201 = scalar_select %p200, %s197, 15
      %s202 = smul.addr %s201, 2
      %s203 = smul.addr %s199, 32
      %s204 = sadd.s32 %s202, %s203
      %s205 = smul.addr %s204, 8
      %s206 = scalar_lea.vmem %s4, %s205
      %p207 = scmp.lt.s32.totalorder %s19, 1
      %s208 = scalar_select %p207, %s19, 1
      %s209 = smul.addr %s208, 80
      %s210 = smul.addr %s209, 8
      %s211 = scalar_lea.vmem %s0, %s210
      %s212 = smul.u32 4, %s20
      %p213 = scmp.lt.s32.totalorder %s19, 1
      %s214 = scalar_select %p213, %s19, 1
      %p215 = scmp.lt.s32.totalorder %s212, 15
      %s216 = scalar_select %p215, %s212, 15
      %s217 = smul.addr %s216, 2
      %s218 = smul.addr %s214, 32
      %s219 = sadd.s32 %s217, %s218
      %s220 = smul.addr %s219, 8
      %s221 = scalar_lea.vmem %s4, %s220
      %s222 = smul.u32 4, %s20
      %s223 = smul.u32 %s20, 4
      %s224 = smul.u32 %s223, 32
      %s225 = scalar_lea.vmem %s211, %s224
      %v226 = vld [vmem:[%s225 + $0x7] sm:$0xff]
      %v227 = vld [vmem:[%s225 + $0xf] sm:$0xff]
      %v228 = vld [vmem:[%s225 + $0x27] sm:$0xff]
      %v229 = vld [vmem:[%s225 + $0x2f] sm:$0xff]
      %v230 = vld [vmem:[%s225 + $0x47] sm:$0xff]
      %v231 = vld [vmem:[%s225 + $0x4f] sm:$0xff]
      %v232 = vld [vmem:[%s225 + $0x67] sm:$0xff]
      %v233 = vld [vmem:[%s225 + $0x6f] sm:$0xff]
      %v234 = vld [vmem:[%s225 + $0x87] sm:$0xff]
      %v235 = vld [vmem:[%s225 + $0x8f] sm:$0xff]
      %v236 = vld [vmem:[%s225 + $0xa7] sm:$0xff]
      %v237 = vld [vmem:[%s225 + $0xaf] sm:$0xff]
      %v238 = vld [vmem:[%s225 + $0xc7] sm:$0xff]
      %v239 = vld [vmem:[%s225 + $0xcf] sm:$0xff]
      %v240 = vld [vmem:[%s225 + $0xe7] sm:$0xff]
      %v241 = vld [vmem:[%s225 + $0xef] sm:$0xff]
      %vm242 = vcmask 64512
      %243 = vst.msk [vmem:[#allocation2] sm:$0xff] %vm242, %v226
      %244 = vst.msk [vmem:[#allocation2 + $0x8] sm:$0xff] %vm242, %v227
      %245 = vst.msk [vmem:[#allocation2 + $0x10] sm:$0xff] %vm242, %v228
      %246 = vst.msk [vmem:[#allocation2 + $0x18] sm:$0xff] %vm242, %v229
      %247 = vst.msk [vmem:[#allocation2 + $0x20] sm:$0xff] %vm242, %v230
      %248 = vst.msk [vmem:[#allocation2 + $0x28] sm:$0xff] %vm242, %v231
      %249 = vst.msk [vmem:[#allocation2 + $0x30] sm:$0xff] %vm242, %v232
      %250 = vst.msk [vmem:[#allocation2 + $0x38] sm:$0xff] %vm242, %v233
      %251 = vst.msk [vmem:[#allocation2 + $0x40] sm:$0xff] %vm242, %v234
      %252 = vst.msk [vmem:[#allocation2 + $0x48] sm:$0xff] %vm242, %v235
      %253 = vst.msk [vmem:[#allocation2 + $0x50] sm:$0xff] %vm242, %v236
      %254 = vst.msk [vmem:[#allocation2 + $0x58] sm:$0xff] %vm242, %v237
      %255 = vst.msk [vmem:[#allocation2 + $0x60] sm:$0xff] %vm242, %v238
      %256 = vst.msk [vmem:[#allocation2 + $0x68] sm:$0xff] %vm242, %v239
      %257 = vst.msk [vmem:[#allocation2 + $0x70] sm:$0xff] %vm242, %v240
      %258 = vst.msk [vmem:[#allocation2 + $0x78] sm:$0xff] %vm242, %v241
      %v259 = vld [vmem:[%s225 + $0x8] sm:$0xff]
      %v260 = vld [vmem:[%s225 + $0x10] sm:$0xff]
      %v261 = vld [vmem:[%s225 + $0x28] sm:$0xff]
      %v262 = vld [vmem:[%s225 + $0x30] sm:$0xff]
      %v263 = vld [vmem:[%s225 + $0x48] sm:$0xff]
      %v264 = vld [vmem:[%s225 + $0x50] sm:$0xff]
      %v265 = vld [vmem:[%s225 + $0x68] sm:$0xff]
      %v266 = vld [vmem:[%s225 + $0x70] sm:$0xff]
      %v267 = vld [vmem:[%s225 + $0x88] sm:$0xff]
      %v268 = vld [vmem:[%s225 + $0x90] sm:$0xff]
      %v269 = vld [vmem:[%s225 + $0xa8] sm:$0xff]
      %v270 = vld [vmem:[%s225 + $0xb0] sm:$0xff]
      %v271 = vld [vmem:[%s225 + $0xc8] sm:$0xff]
      %v272 = vld [vmem:[%s225 + $0xd0] sm:$0xff]
      %v273 = vld [vmem:[%s225 + $0xe8] sm:$0xff]
      %v274 = vld [vmem:[%s225 + $0xf0] sm:$0xff]
      %291 = vrot.lane.b32.xlu0 %v259, 8
      %v292 = vpop.permute.xlu0 %291
      %293 = vrot.lane.b32.xlu0 %v260, 8
      %v294 = vpop.permute.xlu0 %293
      %295 = vrot.lane.b32.xlu0 %v261, 8
      %v296 = vpop.permute.xlu0 %295
      %297 = vrot.lane.b32.xlu0 %v262, 8
      %v298 = vpop.permute.xlu0 %297
      %299 = vrot.lane.b32.xlu0 %v263, 8
      %v300 = vpop.permute.xlu0 %299
      %301 = vrot.lane.b32.xlu0 %v264, 8
      %v302 = vpop.permute.xlu0 %301
      %303 = vrot.lane.b32.xlu0 %v265, 8
      %v304 = vpop.permute.xlu0 %303
      %305 = vrot.lane.b32.xlu0 %v266, 8
      %v306 = vpop.permute.xlu0 %305
      %307 = vrot.lane.b32.xlu0 %v267, 8
      %v308 = vpop.permute.xlu0 %307
      %309 = vrot.lane.b32.xlu0 %v268, 8
      %v310 = vpop.permute.xlu0 %309
      %311 = vrot.lane.b32.xlu0 %v269, 8
      %v312 = vpop.permute.xlu0 %311
      %313 = vrot.lane.b32.xlu0 %v270, 8
      %v314 = vpop.permute.xlu0 %313
      %315 = vrot.lane.b32.xlu0 %v271, 8
      %v316 = vpop.permute.xlu0 %315
      %317 = vrot.lane.b32.xlu0 %v272, 8
      %v318 = vpop.permute.xlu0 %317
      %319 = vrot.lane.b32.xlu0 %v273, 8
      %v320 = vpop.permute.xlu0 %319
      %321 = vrot.lane.b32.xlu0 %v274, 8
      %v322 = vpop.permute.xlu0 %321
      %vm339 = vcmask 130112
      %340 = vst.msk [vmem:[#allocation2] sm:$0xff] %vm339, %v292
      %341 = vst.msk [vmem:[#allocation2 + $0x8] sm:$0xff] %vm339, %v294
      %342 = vst.msk [vmem:[#allocation2 + $0x10] sm:$0xff] %vm339, %v296
      %343 = vst.msk [vmem:[#allocation2 + $0x18] sm:$0xff] %vm339, %v298
      %344 = vst.msk [vmem:[#allocation2 + $0x20] sm:$0xff] %vm339, %v300
      %345 = vst.msk [vmem:[#allocation2 + $0x28] sm:$0xff] %vm339, %v302
      %346 = vst.msk [vmem:[#allocation2 + $0x30] sm:$0xff] %vm339, %v304
      %347 = vst.msk [vmem:[#allocation2 + $0x38] sm:$0xff] %vm339, %v306
      %348 = vst.msk [vmem:[#allocation2 + $0x40] sm:$0xff] %vm339, %v308
      %349 = vst.msk [vmem:[#allocation2 + $0x48] sm:$0xff] %vm339, %v310
      %350 = vst.msk [vmem:[#allocation2 + $0x50] sm:$0xff] %vm339, %v312
      %351 = vst.msk [vmem:[#allocation2 + $0x58] sm:$0xff] %vm339, %v314
      %352 = vst.msk [vmem:[#allocation2 + $0x60] sm:$0xff] %vm339, %v316
      %353 = vst.msk [vmem:[#allocation2 + $0x68] sm:$0xff] %vm339, %v318
      %354 = vst.msk [vmem:[#allocation2 + $0x70] sm:$0xff] %vm339, %v320
      %355 = vst.msk [vmem:[#allocation2 + $0x78] sm:$0xff] %vm339, %v322
      %v356 = vld [vmem:[%s225 + $0x9] sm:$0xff]
      %v357 = vld [vmem:[%s225 + $0x11] sm:$0xff]
      %v358 = vld [vmem:[%s225 + $0x29] sm:$0xff]
      %v359 = vld [vmem:[%s225 + $0x31] sm:$0xff]
      %v360 = vld [vmem:[%s225 + $0x49] sm:$0xff]
      %v361 = vld [vmem:[%s225 + $0x51] sm:$0xff]
      %v362 = vld [vmem:[%s225 + $0x69] sm:$0xff]
      %v363 = vld [vmem:[%s225 + $0x71] sm:$0xff]
      %v364 = vld [vmem:[%s225 + $0x89] sm:$0xff]
      %v365 = vld [vmem:[%s225 + $0x91] sm:$0xff]
      %v366 = vld [vmem:[%s225 + $0xa9] sm:$0xff]
      %v367 = vld [vmem:[%s225 + $0xb1] sm:$0xff]
      %v368 = vld [vmem:[%s225 + $0xc9] sm:$0xff]
      %v369 = vld [vmem:[%s225 + $0xd1] sm:$0xff]
      %v370 = vld [vmem:[%s225 + $0xe9] sm:$0xff]
      %v371 = vld [vmem:[%s225 + $0xf1] sm:$0xff]
      %388 = vrot.lane.b32.xlu0 %v356, 16
      %v389 = vpop.permute.xlu0 %388
      %390 = vrot.lane.b32.xlu0 %v357, 16
      %v391 = vpop.permute.xlu0 %390
      %392 = vrot.lane.b32.xlu0 %v358, 16
      %v393 = vpop.permute.xlu0 %392
      %394 = vrot.lane.b32.xlu0 %v359, 16
      %v395 = vpop.permute.xlu0 %394
      %396 = vrot.lane.b32.xlu0 %v360, 16
      %v397 = vpop.permute.xlu0 %396
      %398 = vrot.lane.b32.xlu0 %v361, 16
      %v399 = vpop.permute.xlu0 %398
      %400 = vrot.lane.b32.xlu0 %v362, 16
      %v401 = vpop.permute.xlu0 %400
      %402 = vrot.lane.b32.xlu0 %v363, 16
      %v403 = vpop.permute.xlu0 %402
      %404 = vrot.lane.b32.xlu0 %v364, 16
      %v405 = vpop.permute.xlu0 %404
      %406 = vrot.lane.b32.xlu0 %v365, 16
      %v407 = vpop.permute.xlu0 %406
      %408 = vrot.lane.b32.xlu0 %v366, 16
      %v409 = vpop.permute.xlu0 %408
      %410 = vrot.lane.b32.xlu0 %v367, 16
      %v411 = vpop.permute.xlu0 %410
      %412 = vrot.lane.b32.xlu0 %v368, 16
      %v413 = vpop.permute.xlu0 %412
      %414 = vrot.lane.b32.xlu0 %v369, 16
      %v415 = vpop.permute.xlu0 %414
      %416 = vrot.lane.b32.xlu0 %v370, 16
      %v417 = vpop.permute.xlu0 %416
      %418 = vrot.lane.b32.xlu0 %v371, 16
      %v419 = vpop.permute.xlu0 %418
      %vm436 = vcmask 195712
      %437 = vst.msk [vmem:[#allocation2] sm:$0xff] %vm436, %v389
      %438 = vst.msk [vmem:[#allocation2 + $0x8] sm:$0xff] %vm436, %v391
      %439 = vst.msk [vmem:[#allocation2 + $0x10] sm:$0xff] %vm436, %v393
      %440 = vst.msk [vmem:[#allocation2 + $0x18] sm:$0xff] %vm436, %v395
      %441 = vst.msk [vmem:[#allocation2 + $0x20] sm:$0xff] %vm436, %v397
      %442 = vst.msk [vmem:[#allocation2 + $0x28] sm:$0xff] %vm436, %v399
      %443 = vst.msk [vmem:[#allocation2 + $0x30] sm:$0xff] %vm436, %v401
      %444 = vst.msk [vmem:[#allocation2 + $0x38] sm:$0xff] %vm436, %v403
      %445 = vst.msk [vmem:[#allocation2 + $0x40] sm:$0xff] %vm436, %v405
      %446 = vst.msk [vmem:[#allocation2 + $0x48] sm:$0xff] %vm436, %v407
      %447 = vst.msk [vmem:[#allocation2 + $0x50] sm:$0xff] %vm436, %v409
      %448 = vst.msk [vmem:[#allocation2 + $0x58] sm:$0xff] %vm436, %v411
      %449 = vst.msk [vmem:[#allocation2 + $0x60] sm:$0xff] %vm436, %v413
      %450 = vst.msk [vmem:[#allocation2 + $0x68] sm:$0xff] %vm436, %v415
      %451 = vst.msk [vmem:[#allocation2 + $0x70] sm:$0xff] %vm436, %v417
      %452 = vst.msk [vmem:[#allocation2 + $0x78] sm:$0xff] %vm436, %v419
      %v453 = vld [vmem:[#allocation2] sm:$0xff]
      %v454 = vld [vmem:[#allocation2 + $0x8] sm:$0xff]
      %v455 = vld [vmem:[#allocation2 + $0x10] sm:$0xff]
      %v456 = vld [vmem:[#allocation2 + $0x18] sm:$0xff]
      %v457 = vld [vmem:[#allocation2 + $0x20] sm:$0xff]
      %v458 = vld [vmem:[#allocation2 + $0x28] sm:$0xff]
      %v459 = vld [vmem:[#allocation2 + $0x30] sm:$0xff]
      %v460 = vld [vmem:[#allocation2 + $0x38] sm:$0xff]
      %v461 = vld [vmem:[#allocation2 + $0x40] sm:$0xff]
      %v462 = vld [vmem:[#allocation2 + $0x48] sm:$0xff]
      %v463 = vld [vmem:[#allocation2 + $0x50] sm:$0xff]
      %v464 = vld [vmem:[#allocation2 + $0x58] sm:$0xff]
      %v465 = vld [vmem:[%s1] sm:$0xff]
      %v466 = vld [vmem:[%s1 + $0x8] sm:$0xff]
      %v467 = vld [vmem:[%s1 + $0x10] sm:$0xff]
      %s468 = scalar_lea.vmem [#allocation2], 16
      %v469 = vld [vmem:[%s468] sm:$0xff]
      %v470 = vld [vmem:[%s468 + $0x8] sm:$0xff]
      %v471 = vld [vmem:[%s468 + $0x10] sm:$0xff]
      %v472 = vld [vmem:[%s468 + $0x18] sm:$0xff]
      %v473 = vld [vmem:[%s468 + $0x20] sm:$0xff]
      %v474 = vld [vmem:[%s468 + $0x28] sm:$0xff]
      %v475 = vld [vmem:[%s468 + $0x30] sm:$0xff]
      %v476 = vld [vmem:[%s468 + $0x38] sm:$0xff]
      %v477 = vld [vmem:[%s468 + $0x40] sm:$0xff]
      %v478 = vld [vmem:[%s468 + $0x48] sm:$0xff]
      %v479 = vld [vmem:[%s468 + $0x50] sm:$0xff]
      %v480 = vld [vmem:[%s468 + $0x58] sm:$0xff]
      %s481 = scalar_lea.vmem %s1, 24
      %v482 = vld [vmem:[%s481] sm:$0xff]
      %v483 = vld [vmem:[%s481 + $0x8] sm:$0xff]
      %v484 = vld [vmem:[%s481 + $0x10] sm:$0xff]
      %vm485 = vcmask 195584
      %v487 = vsel %vm485, %v469, 0
      %v490 = vsel %vm485, %v470, 0
      %v493 = vsel %vm485, %v471, 0
      %v496 = vsel %vm485, %v472, 0
      %v499 = vsel %vm485, %v473, 0
      %v502 = vsel %vm485, %v474, 0
      %v505 = vsel %vm485, %v475, 0
      %v508 = vsel %vm485, %v476, 0
      %v511 = vsel %vm485, %v477, 0
      %v514 = vsel %vm485, %v478, 0
      %v517 = vsel %vm485, %v479, 0
      %v520 = vsel %vm485, %v480, 0
      %522 = vmatpush.msra.mxu0 0.0
      %523 = vmatpush.msra.mxu0 0.0
      %524 = vmatpush.msra.mxu0 0.0
      %525 = vmatpush.msra.mxu0 0.0
      %526 = vmatpush.msra.mxu0 0.0
      %527 = vmatpush.msra.mxu0 0.0
      %528 = vmatpush.msra.mxu0 0.0
      %529 = vmatpush.msra.mxu0 0.0
      %530 = vmatpush.msra.mxu0 0.0
      %531 = vmatpush.msra.mxu0 0.0
      %532 = vmatpush.msra.mxu0 0.0
      %533 = vmatpush.msra.mxu0 0.0
      %534 = vmatpush.msra.mxu0 0.0
      %535 = vmatpush.msra.mxu0 %v484
      %536 = vmatpush.msra.mxu0 %v483
      %537 = vmatpush.msra.mxu0 %v482
      %538 = vmatmul.f32.gmra.mxu0 %v487
      %v539 = vpop.f32.mrf.mxu0
      %v540 = vadd.f32 0.0, %v539
      %541 = vmatmul.f32.gmra.mxu0 %v490
      %v542 = vpop.f32.mrf.mxu0
      %v543 = vadd.f32 0.0, %v542
      %544 = vmatmul.f32.gmra.mxu0 %v493
      %v545 = vpop.f32.mrf.mxu0
      %v546 = vadd.f32 0.0, %v545
      %547 = vmatmul.f32.gmra.mxu0 %v496
      %v548 = vpop.f32.mrf.mxu0
      %v549 = vadd.f32 0.0, %v548
      %550 = vmatmul.f32.gmra.mxu0 %v499
      %v551 = vpop.f32.mrf.mxu0
      %v552 = vadd.f32 0.0, %v551
      %553 = vmatmul.f32.gmra.mxu0 %v502
      %v554 = vpop.f32.mrf.mxu0
      %v555 = vadd.f32 0.0, %v554
      %556 = vmatmul.f32.gmra.mxu0 %v505
      %v557 = vpop.f32.mrf.mxu0
      %v558 = vadd.f32 0.0, %v557
      %559 = vmatmul.f32.gmra.mxu0 %v508
      %v560 = vpop.f32.mrf.mxu0
      %v561 = vadd.f32 0.0, %v560
      %562 = vmatmul.f32.gmra.mxu0 %v511
      %v563 = vpop.f32.mrf.mxu0
      %v564 = vadd.f32 0.0, %v563
      %565 = vmatmul.f32.gmra.mxu0 %v514
      %v566 = vpop.f32.mrf.mxu0
      %v567 = vadd.f32 0.0, %v566
      %568 = vmatmul.f32.gmra.mxu0 %v517
      %v569 = vpop.f32.mrf.mxu0
      %v570 = vadd.f32 0.0, %v569
      %571 = vmatmul.f32.gmra.mxu0 %v520
      %v572 = vpop.f32.mrf.mxu0
      %v573 = vadd.f32 0.0, %v572
      %574 = vdwg.mxu0
      %v576 = vsel %vm485, %v453, 0
      %v579 = vsel %vm485, %v454, 0
      %v582 = vsel %vm485, %v455, 0
      %v585 = vsel %vm485, %v456, 0
      %v588 = vsel %vm485, %v457, 0
      %v591 = vsel %vm485, %v458, 0
      %v594 = vsel %vm485, %v459, 0
      %v597 = vsel %vm485, %v460, 0
      %v600 = vsel %vm485, %v461, 0
      %v603 = vsel %vm485, %v462, 0
      %v606 = vsel %vm485, %v463, 0
      %v609 = vsel %vm485, %v464, 0
      %611 = vmatpush.msra.mxu0 0.0
      %612 = vmatpush.msra.mxu0 0.0
      %613 = vmatpush.msra.mxu0 0.0
      %614 = vmatpush.msra.mxu0 0.0
      %615 = vmatpush.msra.mxu0 0.0
      %616 = vmatpush.msra.mxu0 0.0
      %617 = vmatpush.msra.mxu0 0.0
      %618 = vmatpush.msra.mxu0 0.0
      %619 = vmatpush.msra.mxu0 0.0
      %620 = vmatpush.msra.mxu0 0.0
      %621 = vmatpush.msra.mxu0 0.0
      %622 = vmatpush.msra.mxu0 0.0
      %623 = vmatpush.msra.mxu0 0.0
      %624 = vmatpush.msra.mxu0 %v467
      %625 = vmatpush.msra.mxu0 %v466
      %626 = vmatpush.msra.mxu0 %v465
      %627 = vmatmul.f32.gmra.mxu0 %v576
      %v628 = vpop.f32.mrf.mxu0
      %v629 = vadd.f32 %v540, %v628
      %630 = vmatmul.f32.gmra.mxu0 %v579
      %v631 = vpop.f32.mrf.mxu0
      %v632 = vadd.f32 %v543, %v631
      %633 = vmatmul.f32.gmra.mxu0 %v582
      %v634 = vpop.f32.mrf.mxu0
      %v635 = vadd.f32 %v546, %v634
      %636 = vmatmul.f32.gmra.mxu0 %v585
      %v637 = vpop.f32.mrf.mxu0
      %v638 = vadd.f32 %v549, %v637
      %639 = vmatmul.f32.gmra.mxu0 %v588
      %v640 = vpop.f32.mrf.mxu0
      %v641 = vadd.f32 %v552, %v640
      %642 = vmatmul.f32.gmra.mxu0 %v591
      %v643 = vpop.f32.mrf.mxu0
      %v644 = vadd.f32 %v555, %v643
      %645 = vmatmul.f32.gmra.mxu0 %v594
      %v646 = vpop.f32.mrf.mxu0
      %v647 = vadd.f32 %v558, %v646
      %648 = vmatmul.f32.gmra.mxu0 %v597
      %v649 = vpop.f32.mrf.mxu0
      %v650 = vadd.f32 %v561, %v649
      %651 = vmatmul.f32.gmra.mxu0 %v600
      %v652 = vpop.f32.mrf.mxu0
      %v653 = vadd.f32 %v564, %v652
      %654 = vmatmul.f32.gmra.mxu0 %v603
      %v655 = vpop.f32.mrf.mxu0
      %v656 = vadd.f32 %v567, %v655
      %657 = vmatmul.f32.gmra.mxu0 %v606
      %v658 = vpop.f32.mrf.mxu0
      %v659 = vadd.f32 %v570, %v658
      %660 = vmatmul.f32.gmra.mxu0 %v609
      %v661 = vpop.f32.mrf.mxu0
      %v662 = vadd.f32 %v573, %v661
      %663 = vdwg.mxu0
      %s664 = scalar_lea.vmem [#allocation2], 32
      %v665 = vld [vmem:[%s664] sm:$0xff]
      %v666 = vld [vmem:[%s664 + $0x8] sm:$0xff]
      %v667 = vld [vmem:[%s664 + $0x10] sm:$0xff]
      %v668 = vld [vmem:[%s664 + $0x18] sm:$0xff]
      %v669 = vld [vmem:[%s664 + $0x20] sm:$0xff]
      %v670 = vld [vmem:[%s664 + $0x28] sm:$0xff]
      %v671 = vld [vmem:[%s664 + $0x30] sm:$0xff]
      %v672 = vld [vmem:[%s664 + $0x38] sm:$0xff]
      %v673 = vld [vmem:[%s664 + $0x40] sm:$0xff]
      %v674 = vld [vmem:[%s664 + $0x48] sm:$0xff]
      %v675 = vld [vmem:[%s664 + $0x50] sm:$0xff]
      %v676 = vld [vmem:[%s664 + $0x58] sm:$0xff]
      %s677 = scalar_lea.vmem %s1, 48
      %v678 = vld [vmem:[%s677] sm:$0xff]
      %v679 = vld [vmem:[%s677 + $0x8] sm:$0xff]
      %v680 = vld [vmem:[%s677 + $0x10] sm:$0xff]
      %v682 = vsel %vm485, %v665, 0
      %v685 = vsel %vm485, %v666, 0
      %v688 = vsel %vm485, %v667, 0
      %v691 = vsel %vm485, %v668, 0
      %v694 = vsel %vm485, %v669, 0
      %v697 = vsel %vm485, %v670, 0
      %v700 = vsel %vm485, %v671, 0
      %v703 = vsel %vm485, %v672, 0
      %v706 = vsel %vm485, %v673, 0
      %v709 = vsel %vm485, %v674, 0
      %v712 = vsel %vm485, %v675, 0
      %v715 = vsel %vm485, %v676, 0
      %717 = vmatpush.msra.mxu0 0.0
      %718 = vmatpush.msra.mxu0 0.0
      %719 = vmatpush.msra.mxu0 0.0
      %720 = vmatpush.msra.mxu0 0.0
      %721 = vmatpush.msra.mxu0 0.0
      %722 = vmatpush.msra.mxu0 0.0
      %723 = vmatpush.msra.mxu0 0.0
      %724 = vmatpush.msra.mxu0 0.0
      %725 = vmatpush.msra.mxu0 0.0
      %726 = vmatpush.msra.mxu0 0.0
      %727 = vmatpush.msra.mxu0 0.0
      %728 = vmatpush.msra.mxu0 0.0
      %729 = vmatpush.msra.mxu0 0.0
      %730 = vmatpush.msra.mxu0 %v680
      %731 = vmatpush.msra.mxu0 %v679
      %732 = vmatpush.msra.mxu0 %v678
      %733 = vmatmul.f32.gmra.mxu0 %v682
      %v734 = vpop.f32.mrf.mxu0
      %v735 = vadd.f32 0.0, %v734
      %736 = vmatmul.f32.gmra.mxu0 %v685
      %v737 = vpop.f32.mrf.mxu0
      %v738 = vadd.f32 0.0, %v737
      %739 = vmatmul.f32.gmra.mxu0 %v688
      %v740 = vpop.f32.mrf.mxu0
      %v741 = vadd.f32 0.0, %v740
      %742 = vmatmul.f32.gmra.mxu0 %v691
      %v743 = vpop.f32.mrf.mxu0
      %v744 = vadd.f32 0.0, %v743
      %745 = vmatmul.f32.gmra.mxu0 %v694
      %v746 = vpop.f32.mrf.mxu0
      %v747 = vadd.f32 0.0, %v746
      %748 = vmatmul.f32.gmra.mxu0 %v697
      %v749 = vpop.f32.mrf.mxu0
      %v750 = vadd.f32 0.0, %v749
      %751 = vmatmul.f32.gmra.mxu0 %v700
      %v752 = vpop.f32.mrf.mxu0
      %v753 = vadd.f32 0.0, %v752
      %754 = vmatmul.f32.gmra.mxu0 %v703
      %v755 = vpop.f32.mrf.mxu0
      %v756 = vadd.f32 0.0, %v755
      %757 = vmatmul.f32.gmra.mxu0 %v706
      %v758 = vpop.f32.mrf.mxu0
      %v759 = vadd.f32 0.0, %v758
      %760 = vmatmul.f32.gmra.mxu0 %v709
      %v761 = vpop.f32.mrf.mxu0
      %v762 = vadd.f32 0.0, %v761
      %763 = vmatmul.f32.gmra.mxu0 %v712
      %v764 = vpop.f32.mrf.mxu0
      %v765 = vadd.f32 0.0, %v764
      %766 = vmatmul.f32.gmra.mxu0 %v715
      %v767 = vpop.f32.mrf.mxu0
      %v768 = vadd.f32 0.0, %v767
      %769 = vdwg.mxu0
      %v770 = vadd.f32 %v629, %v735
      %v771 = vadd.f32 %v632, %v738
      %v772 = vadd.f32 %v635, %v741
      %v773 = vadd.f32 %v638, %v744
      %v774 = vadd.f32 %v641, %v747
      %v775 = vadd.f32 %v644, %v750
      %v776 = vadd.f32 %v647, %v753
      %v777 = vadd.f32 %v650, %v756
      %v778 = vadd.f32 %v653, %v759
      %v779 = vadd.f32 %v656, %v762
      %v780 = vadd.f32 %v659, %v765
      %v781 = vadd.f32 %v662, %v768
      %v782 = vld [vmem:[%s3] sm:$0x1]
      %v783 = vperm.slane %v782, 0
      %v784 = vadd.f32 %v770, %v783
      %v785 = vadd.f32 %v771, %v783
      %v786 = vadd.f32 %v772, %v783
      %v787 = vadd.f32 %v773, %v783
      %v788 = vadd.f32 %v774, %v783
      %v789 = vadd.f32 %v775, %v783
      %v790 = vadd.f32 %v776, %v783
      %v791 = vadd.f32 %v777, %v783
      %v792 = vadd.f32 %v778, %v783
      %v793 = vadd.f32 %v779, %v783
      %v794 = vadd.f32 %v780, %v783
      %v795 = vadd.f32 %v781, %v783
      %v796 = vmax.f32 %v784, 0.0
      %v797 = vmax.f32 %v785, 0.0
      %v798 = vmax.f32 %v786, 0.0
      %v799 = vmax.f32 %v787, 0.0
      %v800 = vmax.f32 %v788, 0.0
      %v801 = vmax.f32 %v789, 0.0
      %v802 = vmax.f32 %v790, 0.0
      %v803 = vmax.f32 %v791, 0.0
      %v804 = vmax.f32 %v792, 0.0
      %v805 = vmax.f32 %v793, 0.0
      %v806 = vmax.f32 %v794, 0.0
      %v807 = vmax.f32 %v795, 0.0
      %820 = vrot.lane.b32.xlu0 %v796, 8
      %v821 = vpop.permute.xlu0 %820
      %822 = vrot.lane.b32.xlu0 %v797, 8
      %v823 = vpop.permute.xlu0 %822
      %824 = vrot.lane.b32.xlu0 %v798, 8
      %v825 = vpop.permute.xlu0 %824
      %826 = vrot.lane.b32.xlu0 %v799, 8
      %v827 = vpop.permute.xlu0 %826
      %828 = vrot.lane.b32.xlu0 %v800, 8
      %v829 = vpop.permute.xlu0 %828
      %830 = vrot.lane.b32.xlu0 %v801, 8
      %v831 = vpop.permute.xlu0 %830
      %832 = vrot.lane.b32.xlu0 %v802, 8
      %v833 = vpop.permute.xlu0 %832
      %834 = vrot.lane.b32.xlu0 %v803, 8
      %v835 = vpop.permute.xlu0 %834
      %836 = vrot.lane.b32.xlu0 %v804, 8
      %v837 = vpop.permute.xlu0 %836
      %838 = vrot.lane.b32.xlu0 %v805, 8
      %v839 = vpop.permute.xlu0 %838
      %840 = vrot.lane.b32.xlu0 %v806, 8
      %v841 = vpop.permute.xlu0 %840
      %842 = vrot.lane.b32.xlu0 %v807, 8
      %v843 = vpop.permute.xlu0 %842
      %856 = vst.msk [vmem:[#allocation2] sm:$0xff] %vm339, %v821
      %857 = vst.msk [vmem:[#allocation2 + $0x8] sm:$0xff] %vm339, %v823
      %858 = vst.msk [vmem:[#allocation2 + $0x10] sm:$0xff] %vm339, %v825
      %859 = vst.msk [vmem:[#allocation2 + $0x18] sm:$0xff] %vm339, %v827
      %860 = vst.msk [vmem:[#allocation2 + $0x20] sm:$0xff] %vm339, %v829
      %861 = vst.msk [vmem:[#allocation2 + $0x28] sm:$0xff] %vm339, %v831
      %862 = vst.msk [vmem:[#allocation2 + $0x30] sm:$0xff] %vm339, %v833
      %863 = vst.msk [vmem:[#allocation2 + $0x38] sm:$0xff] %vm339, %v835
      %864 = vst.msk [vmem:[#allocation2 + $0x40] sm:$0xff] %vm339, %v837
      %865 = vst.msk [vmem:[#allocation2 + $0x48] sm:$0xff] %vm339, %v839
      %866 = vst.msk [vmem:[#allocation2 + $0x50] sm:$0xff] %vm339, %v841
      %867 = vst.msk [vmem:[#allocation2 + $0x58] sm:$0xff] %vm339, %v843
      %868 = vst.msk [vmem:[#allocation2 + $0x1] sm:$0xff] %vm242, %v796
      %vm869 = vcmask 63488
      %870 = vst.msk [vmem:[#allocation2 + $0x9] sm:$0x7f] %vm869, %v797
      %871 = vst.msk [vmem:[#allocation2 + $0x11] sm:$0xff] %vm242, %v798
      %872 = vst.msk [vmem:[#allocation2 + $0x19] sm:$0x7f] %vm869, %v799
      %873 = vst.msk [vmem:[#allocation2 + $0x21] sm:$0xff] %vm242, %v800
      %874 = vst.msk [vmem:[#allocation2 + $0x29] sm:$0x7f] %vm869, %v801
      %875 = vst.msk [vmem:[#allocation2 + $0x31] sm:$0xff] %vm242, %v802
      %876 = vst.msk [vmem:[#allocation2 + $0x39] sm:$0x7f] %vm869, %v803
      %877 = vst.msk [vmem:[#allocation2 + $0x41] sm:$0xff] %vm242, %v804
      %878 = vst.msk [vmem:[#allocation2 + $0x49] sm:$0x7f] %vm869, %v805
      %879 = vst.msk [vmem:[#allocation2 + $0x51] sm:$0xff] %vm242, %v806
      %880 = vst.msk [vmem:[#allocation2 + $0x59] sm:$0x7f] %vm869, %v807
      %vm881 = vcmask 57344
      %882 = vst.msk [vmem:[#allocation2] sm:$0x1] %vm881, 0.0
      %883 = vst.msk [vmem:[#allocation2 + $0x10] sm:$0x1] %vm881, 0.0
      %884 = vst.msk [vmem:[#allocation2 + $0x20] sm:$0x1] %vm881, 0.0
      %885 = vst.msk [vmem:[#allocation2 + $0x30] sm:$0x1] %vm881, 0.0
      %886 = vst.msk [vmem:[#allocation2 + $0x40] sm:$0x1] %vm881, 0.0
      %887 = vst.msk [vmem:[#allocation2 + $0x50] sm:$0x1] %vm881, 0.0
      %888 = vrot.lane.b32.xlu0 %v796, 16
      %v889 = vpop.permute.xlu0 %888
      %890 = vrot.lane.b32.xlu0 %v797, 16
      %v891 = vpop.permute.xlu0 %890
      %892 = vrot.lane.b32.xlu0 %v798, 16
      %v893 = vpop.permute.xlu0 %892
      %894 = vrot.lane.b32.xlu0 %v799, 16
      %v895 = vpop.permute.xlu0 %894
      %896 = vrot.lane.b32.xlu0 %v800, 16
      %v897 = vpop.permute.xlu0 %896
      %898 = vrot.lane.b32.xlu0 %v801, 16
      %v899 = vpop.permute.xlu0 %898
      %900 = vrot.lane.b32.xlu0 %v802, 16
      %v901 = vpop.permute.xlu0 %900
      %902 = vrot.lane.b32.xlu0 %v803, 16
      %v903 = vpop.permute.xlu0 %902
      %904 = vrot.lane.b32.xlu0 %v804, 16
      %v905 = vpop.permute.xlu0 %904
      %906 = vrot.lane.b32.xlu0 %v805, 16
      %v907 = vpop.permute.xlu0 %906
      %908 = vrot.lane.b32.xlu0 %v806, 16
      %v909 = vpop.permute.xlu0 %908
      %910 = vrot.lane.b32.xlu0 %v807, 16
      %v911 = vpop.permute.xlu0 %910
      %vm924 = vcmask 195713
      %925 = vst.msk [vmem:[#allocation2 - $0x1] sm:$0xfe] %vm924, %v889
      %926 = vst.msk [vmem:[#allocation2 + $0x7] sm:$0xff] %vm436, %v891
      %927 = vst.msk [vmem:[#allocation2 + $0xf] sm:$0xfe] %vm924, %v893
      %928 = vst.msk [vmem:[#allocation2 + $0x17] sm:$0xff] %vm436, %v895
      %929 = vst.msk [vmem:[#allocation2 + $0x1f] sm:$0xfe] %vm924, %v897
      %930 = vst.msk [vmem:[#allocation2 + $0x27] sm:$0xff] %vm436, %v899
      %931 = vst.msk [vmem:[#allocation2 + $0x2f] sm:$0xfe] %vm924, %v901
      %932 = vst.msk [vmem:[#allocation2 + $0x37] sm:$0xff] %vm436, %v903
      %933 = vst.msk [vmem:[#allocation2 + $0x3f] sm:$0xfe] %vm924, %v905
      %934 = vst.msk [vmem:[#allocation2 + $0x47] sm:$0xff] %vm436, %v907
      %935 = vst.msk [vmem:[#allocation2 + $0x4f] sm:$0xfe] %vm924, %v909
      %936 = vst.msk [vmem:[#allocation2 + $0x57] sm:$0xff] %vm436, %v911
      %vm937 = vcmask 188544
      %938 = vst.msk [vmem:[#allocation2 + $0xf] sm:$0x1] %vm937, 0.0
      %939 = vst.msk [vmem:[#allocation2 + $0x1f] sm:$0x1] %vm937, 0.0
      %940 = vst.msk [vmem:[#allocation2 + $0x2f] sm:$0x1] %vm937, 0.0
      %941 = vst.msk [vmem:[#allocation2 + $0x3f] sm:$0x1] %vm937, 0.0
      %942 = vst.msk [vmem:[#allocation2 + $0x4f] sm:$0x1] %vm937, 0.0
      %943 = vst.msk [vmem:[#allocation2 + $0x5f] sm:$0x1] %vm937, 0.0
      %p944 = scmp.eq.s32.totalorder %s20, 0
      // Predicated region
      $region37: #{tpu_custom_call.1} parent=35 // pred_check
        %p945 = pneg %p944
      $region38: #{tpu_custom_call.1} parent=35 // pred_check_branch
        %947 = sbr.rel (%p945) target = $region40
      $region39: #{tpu_custom_call.1} parent=35 // pred_region
        %948 = vst.msk [vmem:[#allocation2] sm:$0xff] %vm485, 0.0
        %949 = vst.msk [vmem:[#allocation2 + $0x8] sm:$0xff] %vm485, 0.0
      $region40: #{tpu_custom_call.1} parent=35 // pred_fallthru
        _
      %p950 = scmp.eq.s32.totalorder %s20, 3
      // Predicated region
      $region41: #{tpu_custom_call.1} parent=35 // pred_check
        %p951 = pneg %p950
      $region42: #{tpu_custom_call.1} parent=35 // pred_check_branch
        %953 = sbr.rel (%p951) target = $region44
      $region43: #{tpu_custom_call.1} parent=35 // pred_region
        %s954 = scalar_lea.vmem [#allocation2], 80
        %955 = vst.msk [vmem:[%s954] sm:$0xff] %vm485, 0.0
        %956 = vst.msk [vmem:[%s954 + $0x8] sm:$0xff] %vm485, 0.0
      $region44: #{tpu_custom_call.1} parent=35 // pred_fallthru
        _
      %v957 = vld [vmem:[#allocation2] sm:$0xff]
      %v958 = vld [vmem:[#allocation2 + $0x8] sm:$0xff]
      %v959 = vld [vmem:[#allocation2 + $0x10] sm:$0xff]
      %v960 = vld [vmem:[#allocation2 + $0x18] sm:$0xff]
      %v961 = vld [vmem:[#allocation2 + $0x20] sm:$0xff]
      %v962 = vld [vmem:[#allocation2 + $0x28] sm:$0xff]
      %v963 = vld [vmem:[#allocation2 + $0x30] sm:$0xff]
      %v964 = vld [vmem:[#allocation2 + $0x38] sm:$0xff]
      %v965 = vld [vmem:[%s2] sm:$0xff]
      %v966 = vld [vmem:[%s2 + $0x8] sm:$0xff]
      %v967 = vld [vmem:[%s2 + $0x10] sm:$0xff]
      %v968 = vld [vmem:[%s468] sm:$0xff]
      %v969 = vld [vmem:[%s468 + $0x8] sm:$0xff]
      %v970 = vld [vmem:[%s468 + $0x10] sm:$0xff]
      %v971 = vld [vmem:[%s468 + $0x18] sm:$0xff]
      %v972 = vld [vmem:[%s468 + $0x20] sm:$0xff]
      %v973 = vld [vmem:[%s468 + $0x28] sm:$0xff]
      %v974 = vld [vmem:[%s468 + $0x30] sm:$0xff]
      %v975 = vld [vmem:[%s468 + $0x38] sm:$0xff]
      %s976 = scalar_lea.vmem %s2, 24
      %v977 = vld [vmem:[%s976] sm:$0xff]
      %v978 = vld [vmem:[%s976 + $0x8] sm:$0xff]
      %v979 = vld [vmem:[%s976 + $0x10] sm:$0xff]
      %v981 = vsel %vm485, %v968, 0
      %v984 = vsel %vm485, %v969, 0
      %v987 = vsel %vm485, %v970, 0
      %v990 = vsel %vm485, %v971, 0
      %v993 = vsel %vm485, %v972, 0
      %v996 = vsel %vm485, %v973, 0
      %v999 = vsel %vm485, %v974, 0
      %v1002 = vsel %vm485, %v975, 0
      %1004 = vmatpush.msra.mxu0 0.0
      %1005 = vmatpush.msra.mxu0 0.0
      %1006 = vmatpush.msra.mxu0 0.0
      %1007 = vmatpush.msra.mxu0 0.0
      %1008 = vmatpush.msra.mxu0 0.0
      %1009 = vmatpush.msra.mxu0 0.0
      %1010 = vmatpush.msra.mxu0 0.0
      %1011 = vmatpush.msra.mxu0 0.0
      %1012 = vmatpush.msra.mxu0 0.0
      %1013 = vmatpush.msra.mxu0 0.0
      %1014 = vmatpush.msra.mxu0 0.0
      %1015 = vmatpush.msra.mxu0 0.0
      %1016 = vmatpush.msra.mxu0 0.0
      %1017 = vmatpush.msra.mxu0 %v979
      %1018 = vmatpush.msra.mxu0 %v978
      %1019 = vmatpush.msra.mxu0 %v977
      %1020 = vmatmul.f32.gmra.mxu0 %v981
      %v1021 = vpop.f32.mrf.mxu0
      %v1022 = vadd.f32 0.0, %v1021
      %1023 = vmatmul.f32.gmra.mxu0 %v984
      %v1024 = vpop.f32.mrf.mxu0
      %v1025 = vadd.f32 0.0, %v1024
      %1026 = vmatmul.f32.gmra.mxu0 %v987
      %v1027 = vpop.f32.mrf.mxu0
      %v1028 = vadd.f32 0.0, %v1027
      %1029 = vmatmul.f32.gmra.mxu0 %v990
      %v1030 = vpop.f32.mrf.mxu0
      %v1031 = vadd.f32 0.0, %v1030
      %1032 = vmatmul.f32.gmra.mxu0 %v993
      %v1033 = vpop.f32.mrf.mxu0
      %v1034 = vadd.f32 0.0, %v1033
      %1035 = vmatmul.f32.gmra.mxu0 %v996
      %v1036 = vpop.f32.mrf.mxu0
      %v1037 = vadd.f32 0.0, %v1036
      %1038 = vmatmul.f32.gmra.mxu0 %v999
      %v1039 = vpop.f32.mrf.mxu0
      %v1040 = vadd.f32 0.0, %v1039
      %1041 = vmatmul.f32.gmra.mxu0 %v1002
      %v1042 = vpop.f32.mrf.mxu0
      %v1043 = vadd.f32 0.0, %v1042
      %1044 = vdwg.mxu0
      %v1046 = vsel %vm485, %v957, 0
      %v1049 = vsel %vm485, %v958, 0
      %v1052 = vsel %vm485, %v959, 0
      %v1055 = vsel %vm485, %v960, 0
      %v1058 = vsel %vm485, %v961, 0
      %v1061 = vsel %vm485, %v962, 0
      %v1064 = vsel %vm485, %v963, 0
      %v1067 = vsel %vm485, %v964, 0
      %1069 = vmatpush.msra.mxu0 0.0
      %1070 = vmatpush.msra.mxu0 0.0
      %1071 = vmatpush.msra.mxu0 0.0
      %1072 = vmatpush.msra.mxu0 0.0
      %1073 = vmatpush.msra.mxu0 0.0
      %1074 = vmatpush.msra.mxu0 0.0
      %1075 = vmatpush.msra.mxu0 0.0
      %1076 = vmatpush.msra.mxu0 0.0
      %1077 = vmatpush.msra.mxu0 0.0
      %1078 = vmatpush.msra.mxu0 0.0
      %1079 = vmatpush.msra.mxu0 0.0
      %1080 = vmatpush.msra.mxu0 0.0
      %1081 = vmatpush.msra.mxu0 0.0
      %1082 = vmatpush.msra.mxu0 %v967
      %1083 = vmatpush.msra.mxu0 %v966
      %1084 = vmatpush.msra.mxu0 %v965
      %1085 = vmatmul.f32.gmra.mxu0 %v1046
      %v1086 = vpop.f32.mrf.mxu0
      %v1087 = vadd.f32 %v1022, %v1086
      %1088 = vmatmul.f32.gmra.mxu0 %v1049
      %v1089 = vpop.f32.mrf.mxu0
      %v1090 = vadd.f32 %v1025, %v1089
      %1091 = vmatmul.f32.gmra.mxu0 %v1052
      %v1092 = vpop.f32.mrf.mxu0
      %v1093 = vadd.f32 %v1028, %v1092
      %1094 = vmatmul.f32.gmra.mxu0 %v1055
      %v1095 = vpop.f32.mrf.mxu0
      %v1096 = vadd.f32 %v1031, %v1095
      %1097 = vmatmul.f32.gmra.mxu0 %v1058
      %v1098 = vpop.f32.mrf.mxu0
      %v1099 = vadd.f32 %v1034, %v1098
      %1100 = vmatmul.f32.gmra.mxu0 %v1061
      %v1101 = vpop.f32.mrf.mxu0
      %v1102 = vadd.f32 %v1037, %v1101
      %1103 = vmatmul.f32.gmra.mxu0 %v1064
      %v1104 = vpop.f32.mrf.mxu0
      %v1105 = vadd.f32 %v1040, %v1104
      %1106 = vmatmul.f32.gmra.mxu0 %v1067
      %v1107 = vpop.f32.mrf.mxu0
      %v1108 = vadd.f32 %v1043, %v1107
      %1109 = vdwg.mxu0
      %v1110 = vld [vmem:[%s664] sm:$0xff]
      %v1111 = vld [vmem:[%s664 + $0x8] sm:$0xff]
      %v1112 = vld [vmem:[%s664 + $0x10] sm:$0xff]
      %v1113 = vld [vmem:[%s664 + $0x18] sm:$0xff]
      %v1114 = vld [vmem:[%s664 + $0x20] sm:$0xff]
      %v1115 = vld [vmem:[%s664 + $0x28] sm:$0xff]
      %v1116 = vld [vmem:[%s664 + $0x30] sm:$0xff]
      %v1117 = vld [vmem:[%s664 + $0x38] sm:$0xff]
      %s1118 = scalar_lea.vmem %s2, 48
      %v1119 = vld [vmem:[%s1118] sm:$0xff]
      %v1120 = vld [vmem:[%s1118 + $0x8] sm:$0xff]
      %v1121 = vld [vmem:[%s1118 + $0x10] sm:$0xff]
      %v1123 = vsel %vm485, %v1110, 0
      %v1126 = vsel %vm485, %v1111, 0
      %v1129 = vsel %vm485, %v1112, 0
      %v1132 = vsel %vm485, %v1113, 0
      %v1135 = vsel %vm485, %v1114, 0
      %v1138 = vsel %vm485, %v1115, 0
      %v1141 = vsel %vm485, %v1116, 0
      %v1144 = vsel %vm485, %v1117, 0
      %1146 = vmatpush.msra.mxu0 0.0
      %1147 = vmatpush.msra.mxu0 0.0
      %1148 = vmatpush.msra.mxu0 0.0
      %1149 = vmatpush.msra.mxu0 0.0
      %1150 = vmatpush.msra.mxu0 0.0
      %1151 = vmatpush.msra.mxu0 0.0
      %1152 = vmatpush.msra.mxu0 0.0
      %1153 = vmatpush.msra.mxu0 0.0
      %1154 = vmatpush.msra.mxu0 0.0
      %1155 = vmatpush.msra.mxu0 0.0
      %1156 = vmatpush.msra.mxu0 0.0
      %1157 = vmatpush.msra.mxu0 0.0
      %1158 = vmatpush.msra.mxu0 0.0
      %1159 = vmatpush.msra.mxu0 %v1121
      %1160 = vmatpush.msra.mxu0 %v1120
      %1161 = vmatpush.msra.mxu0 %v1119
      %1162 = vmatmul.f32.gmra.mxu0 %v1123
      %v1163 = vpop.f32.mrf.mxu0
      %v1164 = vadd.f32 0.0, %v1163
      %1165 = vmatmul.f32.gmra.mxu0 %v1126
      %v1166 = vpop.f32.mrf.mxu0
      %v1167 = vadd.f32 0.0, %v1166
      %1168 = vmatmul.f32.gmra.mxu0 %v1129
      %v1169 = vpop.f32.mrf.mxu0
      %v1170 = vadd.f32 0.0, %v1169
      %1171 = vmatmul.f32.gmra.mxu0 %v1132
      %v1172 = vpop.f32.mrf.mxu0
      %v1173 = vadd.f32 0.0, %v1172
      %1174 = vmatmul.f32.gmra.mxu0 %v1135
      %v1175 = vpop.f32.mrf.mxu0
      %v1176 = vadd.f32 0.0, %v1175
      %1177 = vmatmul.f32.gmra.mxu0 %v1138
      %v1178 = vpop.f32.mrf.mxu0
      %v1179 = vadd.f32 0.0, %v1178
      %1180 = vmatmul.f32.gmra.mxu0 %v1141
      %v1181 = vpop.f32.mrf.mxu0
      %v1182 = vadd.f32 0.0, %v1181
      %1183 = vmatmul.f32.gmra.mxu0 %v1144
      %v1184 = vpop.f32.mrf.mxu0
      %v1185 = vadd.f32 0.0, %v1184
      %1186 = vdwg.mxu0
      %v1187 = vadd.f32 %v1087, %v1164
      %v1188 = vadd.f32 %v1090, %v1167
      %v1189 = vadd.f32 %v1093, %v1170
      %v1190 = vadd.f32 %v1096, %v1173
      %v1191 = vadd.f32 %v1099, %v1176
      %v1192 = vadd.f32 %v1102, %v1179
      %v1193 = vadd.f32 %v1105, %v1182
      %v1194 = vadd.f32 %v1108, %v1185
      %s1195 = sadd.s32 %s223, 2
      %s1196 = smul.u32 %s1195, 32
      %s1197 = scalar_lea.vmem %s211, %s1196
      %v1198 = vld [vmem:[%s1197 + $0x8] sm:$0xff]
      %v1199 = vld [vmem:[%s1197 + $0x10] sm:$0xff]
      %v1200 = vld [vmem:[%s1197 + $0x28] sm:$0xff]
      %v1201 = vld [vmem:[%s1197 + $0x30] sm:$0xff]
      %v1202 = vld [vmem:[%s1197 + $0x48] sm:$0xff]
      %v1203 = vld [vmem:[%s1197 + $0x50] sm:$0xff]
      %v1204 = vld [vmem:[%s1197 + $0x68] sm:$0xff]
      %v1205 = vld [vmem:[%s1197 + $0x70] sm:$0xff]
      %v1206 = vld [vmem:[%s3 + $0x1] sm:$0x1]
      %v1207 = vperm.slane %v1206, 0
      %v1208 = vadd.f32 %v1187, %v1207
      %v1209 = vadd.f32 %v1188, %v1207
      %v1210 = vadd.f32 %v1189, %v1207
      %v1211 = vadd.f32 %v1190, %v1207
      %v1212 = vadd.f32 %v1191, %v1207
      %v1213 = vadd.f32 %v1192, %v1207
      %v1214 = vadd.f32 %v1193, %v1207
      %v1215 = vadd.f32 %v1194, %v1207
      %v1216 = vadd.f32 %v1208, %v1198
      %v1217 = vadd.f32 %v1209, %v1199
      %v1218 = vadd.f32 %v1210, %v1200
      %v1219 = vadd.f32 %v1211, %v1201
      %v1220 = vadd.f32 %v1212, %v1202
      %v1221 = vadd.f32 %v1213, %v1203
      %v1222 = vadd.f32 %v1214, %v1204
      %v1223 = vadd.f32 %v1215, %v1205
      %v1224 = vmax.f32 %v1216, 0.0
      %v1225 = vmax.f32 %v1217, 0.0
      %v1226 = vmax.f32 %v1218, 0.0
      %v1227 = vmax.f32 %v1219, 0.0
      %v1228 = vmax.f32 %v1220, 0.0
      %v1229 = vmax.f32 %v1221, 0.0
      %v1230 = vmax.f32 %v1222, 0.0
      %v1231 = vmax.f32 %v1223, 0.0
      %1232 = vst.msk [vmem:[%s221] sm:$0xff] %vm242, %v1224
      %1233 = vst.msk [vmem:[%s221 + $0x8] sm:$0xff] %vm242, %v1225
      %1234 = vst.msk [vmem:[%s221 + $0x10] sm:$0xff] %vm242, %v1226
      %1235 = vst.msk [vmem:[%s221 + $0x18] sm:$0xff] %vm242, %v1227
      %1236 = vst.msk [vmem:[%s221 + $0x20] sm:$0xff] %vm242, %v1228
      %1237 = vst.msk [vmem:[%s221 + $0x28] sm:$0xff] %vm242, %v1229
      %1238 = vst.msk [vmem:[%s221 + $0x30] sm:$0xff] %vm242, %v1230
      %1239 = vst.msk [vmem:[%s221 + $0x38] sm:$0xff] %vm242, %v1231
      %s1240 = smul.u32 4, %s20
      %p1241 = scmp.lt.s32.totalorder %s19, 1
      %s1242 = scalar_select %p1241, %s19, 1
      %p1243 = scmp.lt.s32.totalorder %s1240, 15
      %s1244 = scalar_select %p1243, %s1240, 15
      %s1245 = smul.addr %s1244, 2
      %s1246 = smul.addr %s1242, 32
      %s1247 = sadd.s32 %s1245, %s1246
      %s1248 = smul.addr %s1247, 8
      %s1249 = scalar_lea.vmem %s4, %s1248
      // Predicated region
      $region45: #{tpu_custom_call.1} parent=35 // pred_check
        %p1250 = pneg %p136
      $region46: #{tpu_custom_call.1} parent=35 // pred_check_branch
        %1252 = sbr.rel (%p1250) target = $region48
      $region47: #{tpu_custom_call.1} parent=35 // pred_region
        %s1253 = smul.u32 4, %s20
      $region48: #{tpu_custom_call.1} parent=35 // pred_fallthru
        _
    $region36: #{tpu_custom_call.1} parent=5 // pred_fallthru
      _
    %p1254 = scmp.le.s32.totalorder 2, %s10
    // Predicated region
    $region49: #{tpu_custom_call.1} parent=5 // pred_check
      %p1255 = pneg %p1254
    $region50: #{tpu_custom_call.1} parent=5 // pred_check_branch
      %1257 = sbr.rel (%p1255) target = $region52
    $region51: #{tpu_custom_call.1} parent=5 // pred_region
      %s1258 = ssub.s32 %s10, 2
      // Predicated region
      $region53: #{tpu_custom_call.1} parent=51 // pred_check
        %p1259 = pneg %p142
      $region54: #{tpu_custom_call.1} parent=51 // pred_check_branch
        %1261 = sbr.rel (%p1259) target = $region56
      $region55: #{tpu_custom_call.1} parent=51 // pred_region
        %s1262 = smul.u32 4, %s22
        %p1263 = scmp.lt.s32.totalorder %s21, 1
        %s1264 = scalar_select %p1263, %s21, 1
        %p1265 = scmp.lt.s32.totalorder %s1262, 15
        %s1266 = scalar_select %p1265, %s1262, 15
        %s1267 = smul.addr %s1266, 2
        %s1268 = smul.addr %s1264, 32
        %s1269 = sadd.s32 %s1267, %s1268
        %s1270 = smul.addr %s1269, 8
        %s1271 = scalar_lea.vmem %s4, %s1270
      $region56: #{tpu_custom_call.1} parent=51 // pred_fallthru
        _
    $region52: #{tpu_custom_call.1} parent=5 // pred_fallthru
      _
  $region6: #{tpu_custom_call.1} parent=0 // loop_footer
    %s14 = sadd.s32 1, %s10
  $region7: #{tpu_custom_call.1} parent=0 // loop_footer_branch
    %9 = sbr.rel target = $region3
  $region8: #{tpu_custom_call.1} parent=0 // loop_exit
    _

</llo_original>
